<compile_context>
chip_gen: v5e
topology: v5e:2x2
jax: 0.10.0
libtpu: 0.0.40
codegen_flags: <defaults>
</compile_context>

<pallas_src>
from functools import partial

import jax
import jax.numpy as jnp
from jax.experimental import pallas as pl
from jax.experimental.pallas import tpu as pltpu


def gat_kernel(nodes_ref, edges_ref, w_cat_ref, out_ref, *,
               batch_block, n_heads, hidden_dim, neg_slope):
    """One batch block per grid step.

    nodes_ref: (BB, N, in_dim)      VMEM, f32
    edges_ref: (BB, N, N)           VMEM, f32 (or int8 for large N)
    w_cat_ref: (in_dim, H*D + 2H)   VMEM (projection | fused score vectors)
    out_ref:   (BB, H, N*D)         VMEM, lane-dense
    """
    BB, H, D = batch_block, n_heads, hidden_dim
    HD = H * D
    N = nodes_ref.shape[1]
    in_dim = nodes_ref.shape[2]

    x = nodes_ref[...].reshape(BB * N, in_dim)                    # (BB*N, in_dim)
    w_cat = w_cat_ref[...]                                        # (in_dim, HD+2H)

    # Single fat MXU matmul: projection + all heads' score vectors at once.
    proj = jnp.dot(x, w_cat, preferred_element_type=jnp.float32)  # (BB*N, HD+2H)
    mapped = proj[:, :HD]                                         # (BB*N, HD)
    sl_sr_t = proj[:, HD:].T                                      # (2H, BB*N)

    # Values laid out head-major once per grid step; bf16 operands for MXU.
    vals = mapped.reshape(BB, N, H, D).transpose(0, 2, 1, 3)      # (BB, H, N, D)
    vals_bf = vals.astype(jnp.bfloat16)

    for b in range(BB):                                           # static unroll (BB <= 2)
        sl = sl_sr_t[:H, b * N:(b + 1) * N]                       # (H, N)
        sr = sl_sr_t[H:, b * N:(b + 1) * N]                       # (H, N)
        # Rank-1 additive scores for all heads: one VPU broadcast-add.
        s = sl[:, :, None] + sr[:, None, :]                       # (H, N, N)
        # LeakyReLU
        s = jnp.where(s >= 0, s, neg_slope * s)
        # masked_fill(edges == 0, -1e9): one compare per batch element,
        # one broadcast select across all heads.
        no_edge = edges_ref[b] == 0                               # (N, N) bool
        s = jnp.where(no_edge[None, :, :], -1e9, s)
        # Batched softmax over the key axis (reciprocal on the EUP slot).
        s_max = jnp.max(s, axis=-1, keepdims=True)
        p = jnp.exp(s - s_max)
        denom = jnp.sum(p, axis=-1, keepdims=True)
        attn = p * pl.reciprocal(denom, approx=True)              # (H, N, N)
        # Aggregation: head-batched contraction, bf16 operands, f32 accumulate.
        out_b = jnp.einsum('hij,hjd->hid', attn.astype(jnp.bfloat16),
                           vals_bf[b],
                           preferred_element_type=jnp.float32)    # (H, N, D)
        # Lane-dense store: (H, N*D) slab written straight into its row.
        out_ref[b] = jax.nn.sigmoid(out_b).reshape(H, N * D)


def _tensorcores_per_chip():
    try:
        kind = jax.devices()[0].device_kind.lower()
    except Exception:
        return 1
    return 2 if ("v7" in kind or "tpu7" in kind) else 1


def gat_forward(nodes, edges, proj_w, attn_w, *, n_heads, hidden_dim,
                neg_slope=0.2):
    B, N, in_dim = nodes.shape
    H, D = n_heads, hidden_dim
    HD = H * D
    assert proj_w.shape == (in_dim, HD)
    assert attn_w.shape == (H, 2 * D)

    # Pack per-head attention vectors block-diagonally and FOLD the score
    # matmul into the projection (associativity): the kernel's single matmul
    # yields mapped features plus every head's left/right score vectors.
    a1, a2 = attn_w[:, :D], attn_w[:, D:]
    eye = jnp.eye(H, dtype=attn_w.dtype)
    a_left = (a1[:, :, None] * eye[:, None, :]).reshape(HD, H)
    a_right = (a2[:, :, None] * eye[:, None, :]).reshape(HD, H)
    a_packed = jnp.concatenate([a_left, a_right], axis=1)          # (HD, 2H)
    w_cat = jnp.concatenate([proj_w, proj_w @ a_packed], axis=1)   # (in_dim, HD+2H)

    # int8 adjacency only pays off once N reaches a full lane tile.
    edges_in = (edges != 0).astype(jnp.int8) if N >= 128 else edges.astype(jnp.float32)
    e_item = edges_in.dtype.itemsize

    # Batch blocking: single fat grid step on single-TC chips (v5e/v6e);
    # 2 "parallel" steps on 2-TC v7x, subject to a conservative VMEM budget.
    num_tc = _tensorcores_per_chip()

    def bytes_per_block(bb):
        nodes_b = bb * N * in_dim * 4
        edges_b = bb * N * N * e_item
        out_b = bb * H * N * D * 4
        w_b = in_dim * (HD + 2 * H) * 4
        proj_b = bb * N * (HD + 2 * H) * 4
        score_b = 3 * H * N * N * 4          # s / p / attn temporaries
        vals_b = bb * H * N * D * 6          # f32 relayout + bf16 copy
        return 2 * (nodes_b + edges_b + w_b + out_b) + proj_b + score_b + vals_b

    budget = 12 * 1024 * 1024                # stay under the 16 MiB v5e scoped default
    num_blocks = None
    for nb in range(1, B + 1):
        if B % nb != 0 or nb < num_tc:
            continue
        if bytes_per_block(B // nb) <= budget:
            num_blocks = nb
            break
    if num_blocks is None:
        num_blocks = B
    bb = B // num_blocks
    # TODO(synk): for large N, tile the key axis with an online (flash-style)
    # softmax instead of materializing (H, N, N) scores; when B == 1 on a
    # 2-TC chip, split the query-node axis across cores instead of the batch.

    out = pl.pallas_call(
        partial(gat_kernel, batch_block=bb, n_heads=H, hidden_dim=D,
                neg_slope=neg_slope),
        out_shape=jax.ShapeDtypeStruct((B, H, N * D), jnp.float32),
        grid_spec=pltpu.PrefetchScalarGridSpec(
            num_scalar_prefetch=0,
            grid=(num_blocks,),
            in_specs=[
                pl.BlockSpec((bb, N, in_dim), lambda i: (i, 0, 0)),
                pl.BlockSpec((bb, N, N), lambda i: (i, 0, 0)),
                pl.BlockSpec((in_dim, HD + 2 * H), lambda i: (0, 0)),
            ],
            out_specs=pl.BlockSpec((bb, H, N * D), lambda i: (i, 0, 0)),
        ),
        compiler_params=pltpu.CompilerParams(
            dimension_semantics=("parallel",)),
    )(nodes, edges_in, w_cat)

    # (B, H, N*D) is C-order identical to (B, H, N, D), so this reshape matches
    # torch's attn_res.reshape(batch_size, n_nodes, n_heads * hidden_dim)
    # (which deliberately does NOT transpose heads back -- kept for fidelity).
    return out.reshape(B, N, HD)


def gat_reference(nodes, edges, proj_w, attn_w, *, n_heads, hidden_dim,
                  neg_slope=0.2):
    """Pure-JAX mirror of the PyTorch forward (eval mode)."""
    B, N, _ = nodes.shape
    D = hidden_dim
    mapped = (nodes @ proj_w).reshape(B, N, n_heads, D).transpose(0, 2, 1, 3)
    a1, a2 = attn_w[:, :D], attn_w[:, D:]
    s_l = jnp.einsum('bhnd,hd->bhn', mapped, a1)
    s_r = jnp.einsum('bhnd,hd->bhn', mapped, a2)
    scores = s_l[..., :, None] + s_r[..., None, :]
    scores = jnp.where(scores >= 0, scores, neg_slope * scores)
    scores = jnp.where(edges[:, None] == 0, -1e9, scores)
    attn = jax.nn.softmax(scores, axis=-1)
    res = jnp.einsum('bhij,bhjd->bhid', attn, mapped)
    return jax.nn.sigmoid(res.reshape(B, N, n_heads * D))


if __name__ == "__main__":
    # Small shapes consistent with the module: batch=2, n_nodes=16,
    # in_dim=32, hidden_dim (per head)=16, n_heads=4.
    B, N, IN_DIM = 2, 16, 32
    N_HEADS, HID = 4, 16
    NEG_SLOPE = 0.2

    key = jax.random.PRNGKey(0)
    k_nodes, k_edges, k_proj, k_attn = jax.random.split(key, 4)

    nodes = jax.random.normal(k_nodes, (B, N, IN_DIM), dtype=jnp.float32)

    # random 0/1 adjacency, with self-loops to keep softmax well defined
    edges = (jax.random.uniform(k_edges, (B, N, N)) > 0.5).astype(jnp.float32)
    idx = jnp.arange(N)
    edges = edges.at[:, idx, idx].set(1.0)

    # deterministic xavier_uniform init (same fan-in/fan-out rule as torch)
    HD = N_HEADS * HID
    b_proj = (6.0 / (IN_DIM + HD)) ** 0.5
    proj_w = jax.random.uniform(k_proj, (IN_DIM, HD), dtype=jnp.float32,
                                minval=-b_proj, maxval=b_proj)
    b_attn = (6.0 / (N_HEADS + 2 * HID)) ** 0.5
    attn_w = jax.random.uniform(k_attn, (N_HEADS, 2 * HID), dtype=jnp.float32,
                                minval=-b_attn, maxval=b_attn)

    out = gat_forward(nodes, edges, proj_w, attn_w,
                      n_heads=N_HEADS, hidden_dim=HID, neg_slope=NEG_SLOPE)
    out = jax.block_until_ready(out)

    ref = gat_reference(nodes, edges, proj_w, attn_w,
                        n_heads=N_HEADS, hidden_dim=HID, neg_slope=NEG_SLOPE)
    assert out.shape == (B, N, N_HEADS * HID)
    # tolerance absorbs the approximate EUP reciprocal in the softmax
    # normalization and the bf16 operands of the aggregation matmul
    max_diff = jnp.max(jnp.abs(out - ref))
    assert max_diff < 1e-2, f"max abs diff {max_diff}"

    print("KERNEL_OK")
</pallas_src>

<mosaic_0001>
module attributes {stable_mosaic.version = 11 : i64} {
  func.func @gat_kernel(%arg0: i32, %arg1: memref<2x16x32xf32, #tpu.memory_space<vmem>>, %arg2: memref<2x16x16xf32, #tpu.memory_space<vmem>>, %arg3: memref<32x72xf32, #tpu.memory_space<vmem>>, %arg4: memref<2x4x256xf32, #tpu.memory_space<vmem>>) attributes {dimension_semantics = [#tpu.dimension_semantics<parallel>], iteration_bounds = array<i64: 1>, scalar_prefetch = 0 : i64, scratch_operands = 0 : i64, tpu.core_type = #tpu.core_type<tc>, window_params = [{transform_indices = @transform_0, window_bounds = array<i64: 2, 16, 32>}, {transform_indices = @transform_1, window_bounds = array<i64: 2, 16, 16>}, {pipeline_mode = #tpu.pipeline_mode<synchronous>, transform_indices = @transform_2, window_bounds = array<i64: 32, 72>}, {transform_indices = @transform_3, window_bounds = array<i64: 2, 4, 256>}]} {
    %c0 = arith.constant 0 : index
    %c0_0 = arith.constant 0 : index
    %c0_1 = arith.constant 0 : index
    %0 = vector.load %arg1[%c0, %c0_0, %c0_1] : memref<2x16x32xf32, #tpu.memory_space<vmem>>, vector<2x16x32xf32>
    %1 = vector.shape_cast %0 : vector<2x16x32xf32> to vector<32x32xf32>
    %c0_2 = arith.constant 0 : index
    %c0_3 = arith.constant 0 : index
    %2 = vector.load %arg3[%c0_2, %c0_3] : memref<32x72xf32, #tpu.memory_space<vmem>>, vector<32x72xf32>
    %cst = arith.constant dense<0.000000e+00> : vector<32x72xf32>
    %3 = tpu.matmul %1, %2, %cst {dimension_numbers = #tpu.dot_dimension_numbers<[1], [0], [0], [1], [0, 0, 1, 1], [], []>} : vector<32x32xf32>, vector<32x72xf32>, vector<32x72xf32> -> vector<32x72xf32>
    %4 = vector.extract_strided_slice %3 {offsets = [0, 0], sizes = [32, 64], strides = [1, 1]} : vector<32x72xf32> to vector<32x64xf32>
    %5 = vector.extract_strided_slice %3 {offsets = [0, 64], sizes = [32, 8], strides = [1, 1]} : vector<32x72xf32> to vector<32x8xf32>
    %6 = tpu.transpose %5, [1, 0] : vector<32x8xf32> -> vector<8x32xf32>
    %7 = vector.shape_cast %4 : vector<32x64xf32> to vector<2x16x4x16xf32>
    %8 = tpu.transpose %7, [0, 2, 1, 3] : vector<2x16x4x16xf32> -> vector<2x4x16x16xf32>
    %9 = arith.truncf %8 : vector<2x4x16x16xf32> to vector<2x4x16x16xbf16>
    %10 = vector.extract_strided_slice %6 {offsets = [0, 0], sizes = [4, 16], strides = [1, 1]} : vector<8x32xf32> to vector<4x16xf32>
    %11 = vector.extract_strided_slice %6 {offsets = [4, 0], sizes = [4, 16], strides = [1, 1]} : vector<8x32xf32> to vector<4x16xf32>
    %12 = vector.shape_cast %10 : vector<4x16xf32> to vector<4x16x1xf32>
    %13 = vector.shape_cast %11 : vector<4x16xf32> to vector<4x1x16xf32>
    %14 = vector.broadcast %12 : vector<4x16x1xf32> to vector<4x16x16xf32>
    %15 = vector.broadcast %13 : vector<4x1x16xf32> to vector<4x16x16xf32>
    %16 = arith.addf %14, %15 : vector<4x16x16xf32>
    %cst_4 = arith.constant 0.000000e+00 : f32
    %17 = vector.broadcast %cst_4 : f32 to vector<4x16x16xf32>
    %18 = arith.cmpf oge, %16, %17 : vector<4x16x16xf32>
    %cst_5 = arith.constant 2.000000e-01 : f32
    %19 = vector.broadcast %cst_5 : f32 to vector<4x16x16xf32>
    %20 = arith.mulf %19, %16 : vector<4x16x16xf32>
    %21 = arith.select %18, %16, %20 : vector<4x16x16xi1>, vector<4x16x16xf32>
    %c0_6 = arith.constant 0 : index
    %c0_7 = arith.constant 0 : index
    %c0_8 = arith.constant 0 : index
    %22 = vector.load %arg2[%c0_6, %c0_7, %c0_8] : memref<2x16x16xf32, #tpu.memory_space<vmem>>, vector<1x16x16xf32>
    %23 = vector.shape_cast %22 : vector<1x16x16xf32> to vector<16x16xf32>
    %cst_9 = arith.constant 0.000000e+00 : f32
    %24 = vector.broadcast %cst_9 : f32 to vector<16x16xf32>
    %25 = arith.cmpf oeq, %23, %24 : vector<16x16xf32>
    %26 = vector.shape_cast %25 : vector<16x16xi1> to vector<1x16x16xi1>
    %cst_10 = arith.constant -1.000000e+09 : f32
    %27 = vector.shape_cast %26 : vector<1x16x16xi1> to vector<1x16x16xi1>
    %28 = vector.broadcast %27 : vector<1x16x16xi1> to vector<4x16x16xi1>
    %29 = vector.broadcast %cst_10 : f32 to vector<4x16x16xf32>
    %30 = arith.select %28, %29, %21 : vector<4x16x16xi1>, vector<4x16x16xf32>
    %cst_11 = arith.constant dense<0xFF800000> : vector<4x16xf32>
    %31 = vector.multi_reduction <maximumf>, %30, %cst_11 [2] : vector<4x16x16xf32> to vector<4x16xf32>
    %32 = vector.shape_cast %31 : vector<4x16xf32> to vector<4x16x1xf32>
    %33 = vector.broadcast %32 : vector<4x16x1xf32> to vector<4x16x16xf32>
    %34 = arith.subf %30, %33 : vector<4x16x16xf32>
    %35 = math.exp %34 : vector<4x16x16xf32>
    %cst_12 = arith.constant dense<0.000000e+00> : vector<4x16xf32>
    %36 = vector.multi_reduction <add>, %35, %cst_12 [2] : vector<4x16x16xf32> to vector<4x16xf32>
    %37 = vector.shape_cast %36 : vector<4x16xf32> to vector<4x16x1xf32>
    %38 = tpu.reciprocal %37 {approx = true} : vector<4x16x1xf32> -> vector<4x16x1xf32>
    %39 = vector.broadcast %38 : vector<4x16x1xf32> to vector<4x16x16xf32>
    %40 = arith.mulf %35, %39 : vector<4x16x16xf32>
    %41 = arith.truncf %40 : vector<4x16x16xf32> to vector<4x16x16xbf16>
    %42 = vector.extract_strided_slice %9 {offsets = [0, 0, 0, 0], sizes = [1, 4, 16, 16], strides = [1, 1, 1, 1]} : vector<2x4x16x16xbf16> to vector<1x4x16x16xbf16>
    %43 = vector.shape_cast %42 : vector<1x4x16x16xbf16> to vector<4x16x16xbf16>
    "tpu.trace_start"() <{level = 10 : i32, message = "hij,hjd->hid"}> : () -> ()
    %cst_13 = arith.constant dense<0.000000e+00> : vector<4x16x16xf32>
    %44 = tpu.matmul %41, %43, %cst_13 {dimension_numbers = #tpu.dot_dimension_numbers<[2], [1], [1], [2], [0, 0, 0, 1, 1, 2], [0], [0]>} : vector<4x16x16xbf16>, vector<4x16x16xbf16>, vector<4x16x16xf32> -> vector<4x16x16xf32>
    "tpu.trace_stop"() : () -> ()
    %45 = arith.negf %44 : vector<4x16x16xf32>
    %46 = math.exp %45 : vector<4x16x16xf32>
    %cst_14 = arith.constant 1.000000e+00 : f32
    %47 = vector.broadcast %cst_14 : f32 to vector<4x16x16xf32>
    %48 = arith.addf %47, %46 : vector<4x16x16xf32>
    %49 = arith.divf %47, %48 : vector<4x16x16xf32>
    %50 = vector.shape_cast %49 : vector<4x16x16xf32> to vector<4x256xf32>
    %c0_15 = arith.constant 0 : index
    %c0_16 = arith.constant 0 : index
    %c0_17 = arith.constant 0 : index
    %51 = vector.load %arg4[%c0_15, %c0_16, %c0_17] : memref<2x4x256xf32, #tpu.memory_space<vmem>>, vector<1x4x256xf32>
    %52 = vector.shape_cast %51 : vector<1x4x256xf32> to vector<4x256xf32>
    %53 = vector.shape_cast %50 : vector<4x256xf32> to vector<1x4x256xf32>
    tpu.vector_store %arg4[%c0_15, %c0_16, %c0_17], %53 {strides = array<i32>} : memref<2x4x256xf32, #tpu.memory_space<vmem>>, vector<1x4x256xf32>,
    %54 = vector.extract_strided_slice %6 {offsets = [0, 16], sizes = [4, 16], strides = [1, 1]} : vector<8x32xf32> to vector<4x16xf32>
    %55 = vector.extract_strided_slice %6 {offsets = [4, 16], sizes = [4, 16], strides = [1, 1]} : vector<8x32xf32> to vector<4x16xf32>
    %56 = vector.shape_cast %54 : vector<4x16xf32> to vector<4x16x1xf32>
    %57 = vector.shape_cast %55 : vector<4x16xf32> to vector<4x1x16xf32>
    %58 = vector.broadcast %56 : vector<4x16x1xf32> to vector<4x16x16xf32>
    %59 = vector.broadcast %57 : vector<4x1x16xf32> to vector<4x16x16xf32>
    %60 = arith.addf %58, %59 : vector<4x16x16xf32>
    %cst_18 = arith.constant 0.000000e+00 : f32
    %61 = vector.broadcast %cst_18 : f32 to vector<4x16x16xf32>
    %62 = arith.cmpf oge, %60, %61 : vector<4x16x16xf32>
    %cst_19 = arith.constant 2.000000e-01 : f32
    %63 = vector.broadcast %cst_19 : f32 to vector<4x16x16xf32>
    %64 = arith.mulf %63, %60 : vector<4x16x16xf32>
    %65 = arith.select %62, %60, %64 : vector<4x16x16xi1>, vector<4x16x16xf32>
    %c1 = arith.constant 1 : index
    %c0_20 = arith.constant 0 : index
    %c0_21 = arith.constant 0 : index
    %66 = vector.load %arg2[%c1, %c0_20, %c0_21] : memref<2x16x16xf32, #tpu.memory_space<vmem>>, vector<1x16x16xf32>
    %67 = vector.shape_cast %66 : vector<1x16x16xf32> to vector<16x16xf32>
    %cst_22 = arith.constant 0.000000e+00 : f32
    %68 = vector.broadcast %cst_22 : f32 to vector<16x16xf32>
    %69 = arith.cmpf oeq, %67, %68 : vector<16x16xf32>
    %70 = vector.shape_cast %69 : vector<16x16xi1> to vector<1x16x16xi1>
    %cst_23 = arith.constant -1.000000e+09 : f32
    %71 = vector.shape_cast %70 : vector<1x16x16xi1> to vector<1x16x16xi1>
    %72 = vector.broadcast %71 : vector<1x16x16xi1> to vector<4x16x16xi1>
    %73 = vector.broadcast %cst_23 : f32 to vector<4x16x16xf32>
    %74 = arith.select %72, %73, %65 : vector<4x16x16xi1>, vector<4x16x16xf32>
    %cst_24 = arith.constant dense<0xFF800000> : vector<4x16xf32>
    %75 = vector.multi_reduction <maximumf>, %74, %cst_24 [2] : vector<4x16x16xf32> to vector<4x16xf32>
    %76 = vector.shape_cast %75 : vector<4x16xf32> to vector<4x16x1xf32>
    %77 = vector.broadcast %76 : vector<4x16x1xf32> to vector<4x16x16xf32>
    %78 = arith.subf %74, %77 : vector<4x16x16xf32>
    %79 = math.exp %78 : vector<4x16x16xf32>
    %cst_25 = arith.constant dense<0.000000e+00> : vector<4x16xf32>
    %80 = vector.multi_reduction <add>, %79, %cst_25 [2] : vector<4x16x16xf32> to vector<4x16xf32>
    %81 = vector.shape_cast %80 : vector<4x16xf32> to vector<4x16x1xf32>
    %82 = tpu.reciprocal %81 {approx = true} : vector<4x16x1xf32> -> vector<4x16x1xf32>
    %83 = vector.broadcast %82 : vector<4x16x1xf32> to vector<4x16x16xf32>
    %84 = arith.mulf %79, %83 : vector<4x16x16xf32>
    %85 = arith.truncf %84 : vector<4x16x16xf32> to vector<4x16x16xbf16>
    %86 = vector.extract_strided_slice %9 {offsets = [1, 0, 0, 0], sizes = [1, 4, 16, 16], strides = [1, 1, 1, 1]} : vector<2x4x16x16xbf16> to vector<1x4x16x16xbf16>
    %87 = vector.shape_cast %86 : vector<1x4x16x16xbf16> to vector<4x16x16xbf16>
    "tpu.trace_start"() <{level = 10 : i32, message = "hij,hjd->hid"}> : () -> ()
    %cst_26 = arith.constant dense<0.000000e+00> : vector<4x16x16xf32>
    %88 = tpu.matmul %85, %87, %cst_26 {dimension_numbers = #tpu.dot_dimension_numbers<[2], [1], [1], [2], [0, 0, 0, 1, 1, 2], [0], [0]>} : vector<4x16x16xbf16>, vector<4x16x16xbf16>, vector<4x16x16xf32> -> vector<4x16x16xf32>
    "tpu.trace_stop"() : () -> ()
    %89 = arith.negf %88 : vector<4x16x16xf32>
    %90 = math.exp %89 : vector<4x16x16xf32>
    %cst_27 = arith.constant 1.000000e+00 : f32
    %91 = vector.broadcast %cst_27 : f32 to vector<4x16x16xf32>
    %92 = arith.addf %91, %90 : vector<4x16x16xf32>
    %93 = arith.divf %91, %92 : vector<4x16x16xf32>
    %94 = vector.shape_cast %93 : vector<4x16x16xf32> to vector<4x256xf32>
    %c1_28 = arith.constant 1 : index
    %c0_29 = arith.constant 0 : index
    %c0_30 = arith.constant 0 : index
    %95 = vector.load %arg4[%c1_28, %c0_29, %c0_30] : memref<2x4x256xf32, #tpu.memory_space<vmem>>, vector<1x4x256xf32>
    %96 = vector.shape_cast %95 : vector<1x4x256xf32> to vector<4x256xf32>
    %97 = vector.shape_cast %94 : vector<4x256xf32> to vector<1x4x256xf32>
    tpu.vector_store %arg4[%c1_28, %c0_29, %c0_30], %97 {strides = array<i32>} : memref<2x4x256xf32, #tpu.memory_space<vmem>>, vector<1x4x256xf32>,
    return
  }
  func.func @transform_0(%arg0: i32) -> (i32, i32, i32) {
    %c0_i32 = arith.constant 0 : i32
    %c0_i32_0 = arith.constant 0 : i32
    %c0_i32_1 = arith.constant 0 : i32
    return %arg0, %c0_i32, %c0_i32_0 : i32, i32, i32
  }
  func.func @transform_1(%arg0: i32) -> (i32, i32, i32) {
    %c0_i32 = arith.constant 0 : i32
    %c0_i32_0 = arith.constant 0 : i32
    %c0_i32_1 = arith.constant 0 : i32
    return %arg0, %c0_i32, %c0_i32_0 : i32, i32, i32
  }
  func.func @transform_2(%arg0: i32) -> (i32, i32) {
    %c0_i32 = arith.constant 0 : i32
    %c0_i32_0 = arith.constant 0 : i32
    %c0_i32_1 = arith.constant 0 : i32
    return %c0_i32, %c0_i32_0 : i32, i32
  }
  func.func @transform_3(%arg0: i32) -> (i32, i32, i32) {
    %c0_i32 = arith.constant 0 : i32
    %c0_i32_0 = arith.constant 0 : i32
    %c0_i32_1 = arith.constant 0 : i32
    return %arg0, %c0_i32, %c0_i32_0 : i32, i32, i32
  }
}

</mosaic_0001>

<llo_original>
// kernel: tpu_custom_call.1
$region0: #{tpu_custom_call.1}
  #allocation0 [shape = 'u32[]', space=smem, size = 0x4, offset = 0x4, fixed_abs, tag = 'smem constant byte address 0x4 - core index']
  #allocation1 [shape = 'u32[72,128]{1,0:T(1,128)}', space=vmem, size = 0x9000, scoped, tag = 'internal scratch']
  %s0 = inlined_call_operand.hbm [shape: f32[2,16,32], index: 0, kind: input, shape index: {}]
  %s1 = inlined_call_operand.hbm [shape: f32[2,16,16], index: 1, kind: input, shape index: {}]
  %s2 = inlined_call_operand.hbm [shape: f32[32,72], index: 2, kind: input, shape index: {}]
  %s3 = inlined_call_operand.hbm [shape: f32[2,4,256], index: 3, kind: output, shape index: {}]
  %s4 = sld [smem:[#allocation0]]
  $region34: #{tpu_custom_call.1} parent=0
    _
  %s6 = ssub.s32 1, %s4
  %s7 = scalar_select 0, %s6, %s4
  $region1: #{tpu_custom_call.1} parent=0
    #allocation2 [shape = 'u8[16384]{0}', space=vmem, size = 0x4000, scoped, tag = 'input window, operand 0, single buffered']
    #allocation3 [shape = 's32[1]{0}', space=sflag, size = 0x4, scoped, tag = 'scoped memory for tpu_custom_call.1']
    #allocation4 [shape = 's32[1]{0}', space=sflag, size = 0x4, scoped, tag = 'scoped memory for tpu_custom_call.1']
    #allocation5 [shape = 'u8[16384]{0}', space=vmem, size = 0x4000, scoped, tag = 'input window, operand 1, single buffered']
    #allocation6 [shape = 's32[1]{0}', space=sflag, size = 0x4, scoped, tag = 'scoped memory for tpu_custom_call.1']
    #allocation7 [shape = 'u8[16384]{0}', space=vmem, size = 0x4000, scoped, tag = 'input window, operand 2, single buffered']
    #allocation8 [shape = 'u8[8192]{0}', space=vmem, size = 0x2000, scoped, tag = 'output window, operand 0, single buffered']
    %8 = vsyncpa [#allocation3], 0
    %9 = vsyncpa [#allocation6], 0
    %10 = vsyncpa [#allocation4], 0
    // Predicated region
    $region2: #{tpu_custom_call.1} parent=1 // pred_check
      _
    $region3: #{tpu_custom_call.1} parent=1 // pred_check_branch
      %12 = sbr.rel (0) target = $region5
    $region4: #{tpu_custom_call.1} parent=1 // pred_region
      %14 = vsyncadd [#allocation3], 0
      %s15 = sshll.u32 %s0, 4
      %s16 = int_to_ptr.hbm [resolvable:$true] %s15
      %s17 = sshll.u32 [#allocation2], 4
      %s18 = int_to_ptr.vmem [resolvable:$true] %s17
      %23 = dma.hbm_to_vmem [thread:$0]  %s16, 512, %s18, [#allocation3], 128, 128, 8
    $region5: #{tpu_custom_call.1} parent=1 // pred_fallthru
      _
    // Predicated region
    $region6: #{tpu_custom_call.1} parent=1 // pred_check
      _
    $region7: #{tpu_custom_call.1} parent=1 // pred_check_branch
      %25 = sbr.rel (0) target = $region9
    $region8: #{tpu_custom_call.1} parent=1 // pred_region
      %27 = vsyncadd [#allocation6], 0
      %s28 = sshll.u32 %s1, 4
      %s29 = int_to_ptr.hbm [resolvable:$true] %s28
      %s30 = sshll.u32 [#allocation5], 4
      %s31 = int_to_ptr.vmem [resolvable:$true] %s30
      %36 = dma.hbm_to_vmem [thread:$0]  %s29, 512, %s31, [#allocation6], 128, 128, 8
    $region9: #{tpu_custom_call.1} parent=1 // pred_fallthru
      _
    // Predicated region
    $region10: #{tpu_custom_call.1} parent=1 // pred_check
      _
    $region11: #{tpu_custom_call.1} parent=1 // pred_check_branch
      %38 = sbr.rel (0) target = $region13
    $region12: #{tpu_custom_call.1} parent=1 // pred_region
      %40 = vsyncadd [#allocation6], 0
      %s41 = sshll.u32 %s2, 4
      %s42 = int_to_ptr.hbm [resolvable:$true] %s41
      %s43 = sshll.u32 [#allocation7], 4
      %s44 = int_to_ptr.vmem [resolvable:$true] %s43
      %49 = dma.hbm_to_vmem [thread:$0]  %s42, 512, %s44, [#allocation6], 128, 128, 8
    $region13: #{tpu_custom_call.1} parent=1 // pred_fallthru
      _
    // Predicated region
    $region14: #{tpu_custom_call.1} parent=1 // pred_check
      _
    $region15: #{tpu_custom_call.1} parent=1 // pred_check_branch
      %51 = sbr.rel (0) target = $region17
    $region16: #{tpu_custom_call.1} parent=1 // pred_region
      %53 = dma.done [#allocation3], 512
    $region17: #{tpu_custom_call.1} parent=1 // pred_fallthru
      _
    // Predicated region
    $region18: #{tpu_custom_call.1} parent=1 // pred_check
      _
    $region19: #{tpu_custom_call.1} parent=1 // pred_check_branch
      %55 = sbr.rel (0) target = $region21
    $region20: #{tpu_custom_call.1} parent=1 // pred_region
      %57 = dma.done [#allocation6], 512
    $region21: #{tpu_custom_call.1} parent=1 // pred_fallthru
      _
    // Predicated region
    $region22: #{tpu_custom_call.1} parent=1 // pred_check
      _
    $region23: #{tpu_custom_call.1} parent=1 // pred_check_branch
      %59 = sbr.rel (0) target = $region25
    $region24: #{tpu_custom_call.1} parent=1 // pred_region
      %61 = dma.done [#allocation6], 512
    $region25: #{tpu_custom_call.1} parent=1 // pred_fallthru
      _
    %v63 = vld [vmem:[#allocation2] sm:$0xff]
    %v64 = vld [vmem:[#allocation2 + $0x8] sm:$0xff]
    %v65 = vld [vmem:[#allocation2 + $0x10] sm:$0xff]
    %v66 = vld [vmem:[#allocation2 + $0x18] sm:$0xff]
    %v67 = vld [vmem:[#allocation7] sm:$0xff]
    %v68 = vld [vmem:[#allocation7 + $0x8] sm:$0xff]
    %v69 = vld [vmem:[#allocation7 + $0x10] sm:$0xff]
    %v70 = vld [vmem:[#allocation7 + $0x18] sm:$0xff]
    %vm71 = vcmask 261120
    %v73 = vsel %vm71, %v63, 0
    %v76 = vsel %vm71, %v64, 0
    %v79 = vsel %vm71, %v65, 0
    %v82 = vsel %vm71, %v66, 0
    %84 = vmatpush.msra.mxu0 0.0
    %85 = vmatpush.msra.mxu0 0.0
    %86 = vmatpush.msra.mxu0 0.0
    %87 = vmatpush.msra.mxu0 0.0
    %88 = vmatpush.msra.mxu0 0.0
    %89 = vmatpush.msra.mxu0 0.0
    %90 = vmatpush.msra.mxu0 0.0
    %91 = vmatpush.msra.mxu0 0.0
    %92 = vmatpush.msra.mxu0 0.0
    %93 = vmatpush.msra.mxu0 0.0
    %94 = vmatpush.msra.mxu0 0.0
    %95 = vmatpush.msra.mxu0 0.0
    %96 = vmatpush.msra.mxu0 %v70
    %97 = vmatpush.msra.mxu0 %v69
    %98 = vmatpush.msra.mxu0 %v68
    %99 = vmatpush.msra.mxu0 %v67
    %100 = vmatmul.f32.gmra.mxu0 %v73
    %v101 = vpop.f32.mrf.mxu0
    %v102 = vadd.f32 0.0, %v101
    %103 = vmatmul.f32.gmra.mxu0 %v76
    %v104 = vpop.f32.mrf.mxu0
    %v105 = vadd.f32 0.0, %v104
    %106 = vmatmul.f32.gmra.mxu0 %v79
    %v107 = vpop.f32.mrf.mxu0
    %v108 = vadd.f32 0.0, %v107
    %109 = vmatmul.f32.gmra.mxu0 %v82
    %v110 = vpop.f32.mrf.mxu0
    %v111 = vadd.f32 0.0, %v110
    %112 = vdwg.mxu0
    %117 = vrot.lane.b32.xlu0 %v102, 64
    %v118 = vpop.permute.xlu0 %117
    %119 = vrot.lane.b32.xlu0 %v105, 64
    %v120 = vpop.permute.xlu0 %119
    %121 = vrot.lane.b32.xlu0 %v108, 64
    %v122 = vpop.permute.xlu0 %121
    %123 = vrot.lane.b32.xlu0 %v111, 64
    %v124 = vpop.permute.xlu0 %123
    %129 = vxpose.xlu0.b32.start [1/16] %v118, 128
    %130 = vxpose.xlu0.b32.cont [2/16] %v120, 128
    %131 = vxpose.xlu0.b32.cont [3/16] %v122, 128
    %132 = vxpose.xlu0.b32.cont [4/16] %v124, 128
    %133 = vxpose.xlu0.b32.cont [5/16] 0.0, 128
    %134 = vxpose.xlu0.b32.cont [6/16] 0.0, 128
    %135 = vxpose.xlu0.b32.cont [7/16] 0.0, 128
    %136 = vxpose.xlu0.b32.cont [8/16] 0.0, 128
    %137 = vxpose.xlu0.b32.cont [9/16] 0.0, 128
    %138 = vxpose.xlu0.b32.cont [10/16] 0.0, 128
    %139 = vxpose.xlu0.b32.cont [11/16] 0.0, 128
    %140 = vxpose.xlu0.b32.cont [12/16] 0.0, 128
    %141 = vxpose.xlu0.b32.cont [13/16] 0.0, 128
    %142 = vxpose.xlu0.b32.cont [14/16] 0.0, 128
    %143 = vxpose.xlu0.b32.cont [15/16] 0.0, 128
    %144 = vxpose.xlu0.b32.end [16/16] 0.0, 128
    %v145 = vpop.trf.xlu0
    %v146 = vpop.trf.xlu0
    %v147 = vpop.trf.xlu0
    %v148 = vpop.trf.xlu0
    %v149 = vpop.trf.xlu0
    %v150 = vpop.trf.xlu0
    %v151 = vpop.trf.xlu0
    %v152 = vpop.trf.xlu0
    %v153 = vpop.trf.xlu0
    %v154 = vpop.trf.xlu0
    %v155 = vpop.trf.xlu0
    %v156 = vpop.trf.xlu0
    %v157 = vpop.trf.xlu0
    %v158 = vpop.trf.xlu0
    %v159 = vpop.trf.xlu0
    %v160 = vpop.trf.xlu0
    %161 = vrot.lane.b32.xlu0 %v102, 112
    %v162 = vpop.permute.xlu0 %161
    %163 = vrot.lane.b32.xlu0 %v105, 112
    %v164 = vpop.permute.xlu0 %163
    %165 = vrot.lane.b32.xlu0 %v108, 112
    %v166 = vpop.permute.xlu0 %165
    %167 = vrot.lane.b32.xlu0 %v111, 112
    %v168 = vpop.permute.xlu0 %167
    %173 = vrot.lane.b32.xlu0 %v102, 96
    %v174 = vpop.permute.xlu0 %173
    %175 = vrot.lane.b32.xlu0 %v105, 96
    %v176 = vpop.permute.xlu0 %175
    %177 = vrot.lane.b32.xlu0 %v108, 96
    %v178 = vpop.permute.xlu0 %177
    %179 = vrot.lane.b32.xlu0 %v111, 96
    %v180 = vpop.permute.xlu0 %179
    %185 = vrot.lane.b32.xlu0 %v102, 80
    %v186 = vpop.permute.xlu0 %185
    %187 = vrot.lane.b32.xlu0 %v105, 80
    %v188 = vpop.permute.xlu0 %187
    %189 = vrot.lane.b32.xlu0 %v108, 80
    %v190 = vpop.permute.xlu0 %189
    %191 = vrot.lane.b32.xlu0 %v111, 80
    %v192 = vpop.permute.xlu0 %191
    %v197 = vrot.slane %v174, 4
    %vm198 = vcmask 1047556
    %v199 = vsel %vm198, %v197, %v102
    %v200 = vrot.slane %v102, 4
    %v201 = vsel %vm198, %v174, %v200
    %v203 = vunpack.c.l.s4 1983009808
    %v204 = vunpack.c.0.s8 %v203
    %v205 = vperm.slane %v199, %v204
    %v207 = vunpack.c.l.s4 1983009808
    %v208 = vunpack.c.0.s8 %v207
    %v209 = vperm.slane %v201, %v208
    %v210 = vrot.slane %v186, 4
    %v211 = vsel %vm198, %v210, %v162
    %v212 = vrot.slane %v162, 4
    %v213 = vsel %vm198, %v186, %v212
    %v215 = vunpack.c.l.s4 1983009808
    %v216 = vunpack.c.0.s8 %v215
    %v217 = vperm.slane %v211, %v216
    %v219 = vunpack.c.l.s4 1983009808
    %v220 = vunpack.c.0.s8 %v219
    %v221 = vperm.slane %v213, %v220
    %v222 = vrot.slane %v217, 4
    %v223 = vsel %vm198, %v222, %v205
    %v224 = vrot.slane %v205, 4
    %v225 = vsel %vm198, %v217, %v224
    %v227 = vunpack.c.l.s4 1934713408
    %v228 = vunpack.c.0.s8 %v227
    %v229 = vperm.slane %v223, %v228
    %v231 = vunpack.c.l.s4 1934713408
    %v232 = vunpack.c.0.s8 %v231
    %v233 = vperm.slane %v225, %v232
    %v234 = vrot.slane %v221, 4
    %v235 = vsel %vm198, %v234, %v209
    %v236 = vrot.slane %v209, 4
    %v237 = vsel %vm198, %v221, %v236
    %v239 = vunpack.c.l.s4 1934713408
    %v240 = vunpack.c.0.s8 %v239
    %v241 = vperm.slane %v235, %v240
    %v243 = vunpack.c.l.s4 1934713408
    %v244 = vunpack.c.0.s8 %v243
    %v245 = vperm.slane %v237, %v244
    %v246 = vrot.slane %v229, 4
    %v247 = vsel %vm198, 0.0, %v246
    %v248 = vrot.slane %v233, 4
    %v249 = vsel %vm198, 0.0, %v248
    %v250 = vrot.slane %v241, 4
    %v251 = vsel %vm198, 0.0, %v250
    %v252 = vrot.slane %v245, 4
    %v253 = vsel %vm198, 0.0, %v252
    %v254 = vrot.slane %v176, 4
    %v255 = vsel %vm198, %v254, %v105
    %v256 = vrot.slane %v105, 4
    %v257 = vsel %vm198, %v176, %v256
    %v259 = vunpack.c.l.s4 1983009808
    %v260 = vunpack.c.0.s8 %v259
    %v261 = vperm.slane %v255, %v260
    %v263 = vunpack.c.l.s4 1983009808
    %v264 = vunpack.c.0.s8 %v263
    %v265 = vperm.slane %v257, %v264
    %v266 = vrot.slane %v188, 4
    %v267 = vsel %vm198, %v266, %v164
    %v268 = vrot.slane %v164, 4
    %v269 = vsel %vm198, %v188, %v268
    %v271 = vunpack.c.l.s4 1983009808
    %v272 = vunpack.c.0.s8 %v271
    %v273 = vperm.slane %v267, %v272
    %v275 = vunpack.c.l.s4 1983009808
    %v276 = vunpack.c.0.s8 %v275
    %v277 = vperm.slane %v269, %v276
    %v278 = vrot.slane %v273, 4
    %v279 = vsel %vm198, %v278, %v261
    %v280 = vrot.slane %v261, 4
    %v281 = vsel %vm198, %v273, %v280
    %v283 = vunpack.c.l.s4 1934713408
    %v284 = vunpack.c.0.s8 %v283
    %v285 = vperm.slane %v279, %v284
    %v287 = vunpack.c.l.s4 1934713408
    %v288 = vunpack.c.0.s8 %v287
    %v289 = vperm.slane %v281, %v288
    %v290 = vrot.slane %v277, 4
    %v291 = vsel %vm198, %v290, %v265
    %v292 = vrot.slane %v265, 4
    %v293 = vsel %vm198, %v277, %v292
    %v295 = vunpack.c.l.s4 1934713408
    %v296 = vunpack.c.0.s8 %v295
    %v297 = vperm.slane %v291, %v296
    %v299 = vunpack.c.l.s4 1934713408
    %v300 = vunpack.c.0.s8 %v299
    %v301 = vperm.slane %v293, %v300
    %v302 = vrot.slane %v285, 4
    %v303 = vsel %vm198, 0.0, %v302
    %v304 = vrot.slane %v289, 4
    %v305 = vsel %vm198, 0.0, %v304
    %v306 = vrot.slane %v297, 4
    %v307 = vsel %vm198, 0.0, %v306
    %v308 = vrot.slane %v301, 4
    %v309 = vsel %vm198, 0.0, %v308
    %v310 = vrot.slane %v178, 4
    %v311 = vsel %vm198, %v310, %v108
    %v312 = vrot.slane %v108, 4
    %v313 = vsel %vm198, %v178, %v312
    %v315 = vunpack.c.l.s4 1983009808
    %v316 = vunpack.c.0.s8 %v315
    %v317 = vperm.slane %v311, %v316
    %v319 = vunpack.c.l.s4 1983009808
    %v320 = vunpack.c.0.s8 %v319
    %v321 = vperm.slane %v313, %v320
    %v322 = vrot.slane %v190, 4
    %v323 = vsel %vm198, %v322, %v166
    %v324 = vrot.slane %v166, 4
    %v325 = vsel %vm198, %v190, %v324
    %v327 = vunpack.c.l.s4 1983009808
    %v328 = vunpack.c.0.s8 %v327
    %v329 = vperm.slane %v323, %v328
    %v331 = vunpack.c.l.s4 1983009808
    %v332 = vunpack.c.0.s8 %v331
    %v333 = vperm.slane %v325, %v332
    %v334 = vrot.slane %v329, 4
    %v335 = vsel %vm198, %v334, %v317
    %v336 = vrot.slane %v317, 4
    %v337 = vsel %vm198, %v329, %v336
    %v339 = vunpack.c.l.s4 1934713408
    %v340 = vunpack.c.0.s8 %v339
    %v341 = vperm.slane %v335, %v340
    %v343 = vunpack.c.l.s4 1934713408
    %v344 = vunpack.c.0.s8 %v343
    %v345 = vperm.slane %v337, %v344
    %v346 = vrot.slane %v333, 4
    %v347 = vsel %vm198, %v346, %v321
    %v348 = vrot.slane %v321, 4
    %v349 = vsel %vm198, %v333, %v348
    %v351 = vunpack.c.l.s4 1934713408
    %v352 = vunpack.c.0.s8 %v351
    %v353 = vperm.slane %v347, %v352
    %v355 = vunpack.c.l.s4 1934713408
    %v356 = vunpack.c.0.s8 %v355
    %v357 = vperm.slane %v349, %v356
    %v358 = vrot.slane %v341, 4
    %v359 = vsel %vm198, 0.0, %v358
    %v360 = vrot.slane %v345, 4
    %v361 = vsel %vm198, 0.0, %v360
    %v362 = vrot.slane %v353, 4
    %v363 = vsel %vm198, 0.0, %v362
    %v364 = vrot.slane %v357, 4
    %v365 = vsel %vm198, 0.0, %v364
    %v366 = vrot.slane %v180, 4
    %v367 = vsel %vm198, %v366, %v111
    %v368 = vrot.slane %v111, 4
    %v369 = vsel %vm198, %v180, %v368
    %v371 = vunpack.c.l.s4 1983009808
    %v372 = vunpack.c.0.s8 %v371
    %v373 = vperm.slane %v367, %v372
    %v375 = vunpack.c.l.s4 1983009808
    %v376 = vunpack.c.0.s8 %v375
    %v377 = vperm.slane %v369, %v376
    %v378 = vrot.slane %v192, 4
    %v379 = vsel %vm198, %v378, %v168
    %v380 = vrot.slane %v168, 4
    %v381 = vsel %vm198, %v192, %v380
    %v383 = vunpack.c.l.s4 1983009808
    %v384 = vunpack.c.0.s8 %v383
    %v385 = vperm.slane %v379, %v384
    %v387 = vunpack.c.l.s4 1983009808
    %v388 = vunpack.c.0.s8 %v387
    %v389 = vperm.slane %v381, %v388
    %v390 = vrot.slane %v385, 4
    %v391 = vsel %vm198, %v390, %v373
    %v392 = vrot.slane %v373, 4
    %v393 = vsel %vm198, %v385, %v392
    %v395 = vunpack.c.l.s4 1934713408
    %v396 = vunpack.c.0.s8 %v395
    %v397 = vperm.slane %v391, %v396
    %v399 = vunpack.c.l.s4 1934713408
    %v400 = vunpack.c.0.s8 %v399
    %v401 = vperm.slane %v393, %v400
    %v402 = vrot.slane %v389, 4
    %v403 = vsel %vm198, %v402, %v377
    %v404 = vrot.slane %v377, 4
    %v405 = vsel %vm198, %v389, %v404
    %v407 = vunpack.c.l.s4 1934713408
    %v408 = vunpack.c.0.s8 %v407
    %v409 = vperm.slane %v403, %v408
    %v411 = vunpack.c.l.s4 1934713408
    %v412 = vunpack.c.0.s8 %v411
    %v413 = vperm.slane %v405, %v412
    %v414 = vrot.slane %v397, 4
    %v415 = vsel %vm198, 0.0, %v414
    %v416 = vrot.slane %v401, 4
    %v417 = vsel %vm198, 0.0, %v416
    %v418 = vrot.slane %v409, 4
    %v419 = vsel %vm198, 0.0, %v418
    %v420 = vrot.slane %v413, 4
    %v421 = vsel %vm198, 0.0, %v420
    %v422 = vsel %vm198, %v248, %v229
    %v424 = vunpack.c.l.s4 1983009808
    %v425 = vunpack.c.0.s8 %v424
    %v426 = vperm.slane %v422, %v425
    %v427 = vrot.slane %v249, 4
    %v428 = vsel %vm198, %v427, %v247
    %v430 = vunpack.c.l.s4 1983009808
    %v431 = vunpack.c.0.s8 %v430
    %v432 = vperm.slane %v428, %v431
    %v433 = vsel %vm198, %v252, %v241
    %v435 = vunpack.c.l.s4 1983009808
    %v436 = vunpack.c.0.s8 %v435
    %v437 = vperm.slane %v433, %v436
    %v438 = vrot.slane %v253, 4
    %v439 = vsel %vm198, %v438, %v251
    %v441 = vunpack.c.l.s4 1983009808
    %v442 = vunpack.c.0.s8 %v441
    %v443 = vperm.slane %v439, %v442
    %v444 = vrot.slane %v432, 4
    %v445 = vsel %vm198, %v444, %v426
    %v446 = vrot.slane %v426, 4
    %v447 = vsel %vm198, %v432, %v446
    %v449 = vunpack.c.l.s4 1934713408
    %v450 = vunpack.c.0.s8 %v449
    %v451 = vperm.slane %v445, %v450
    %v453 = vunpack.c.l.s4 1934713408
    %v454 = vunpack.c.0.s8 %v453
    %v455 = vperm.slane %v447, %v454
    %v456 = vrot.slane %v443, 4
    %v457 = vsel %vm198, %v456, %v437
    %v458 = vrot.slane %v437, 4
    %v459 = vsel %vm198, %v443, %v458
    %v461 = vunpack.c.l.s4 1934713408
    %v462 = vunpack.c.0.s8 %v461
    %v463 = vperm.slane %v457, %v462
    %v465 = vunpack.c.l.s4 1934713408
    %v466 = vunpack.c.0.s8 %v465
    %v467 = vperm.slane %v459, %v466
    %v468 = vrot.slane %v463, 4
    %v469 = vsel %vm198, %v468, %v451
    %v470 = vrot.slane %v451, 4
    %v471 = vsel %vm198, %v463, %v470
    %v472 = vrot.slane %v467, 4
    %v473 = vsel %vm198, %v472, %v455
    %v474 = vrot.slane %v455, 4
    %v475 = vsel %vm198, %v467, %v474
    %v476 = vsel %vm198, %v304, %v285
    %v478 = vunpack.c.l.s4 1983009808
    %v479 = vunpack.c.0.s8 %v478
    %v480 = vperm.slane %v476, %v479
    %v481 = vrot.slane %v305, 4
    %v482 = vsel %vm198, %v481, %v303
    %v484 = vunpack.c.l.s4 1983009808
    %v485 = vunpack.c.0.s8 %v484
    %v486 = vperm.slane %v482, %v485
    %v487 = vsel %vm198, %v308, %v297
    %v489 = vunpack.c.l.s4 1983009808
    %v490 = vunpack.c.0.s8 %v489
    %v491 = vperm.slane %v487, %v490
    %v492 = vrot.slane %v309, 4
    %v493 = vsel %vm198, %v492, %v307
    %v495 = vunpack.c.l.s4 1983009808
    %v496 = vunpack.c.0.s8 %v495
    %v497 = vperm.slane %v493, %v496
    %v498 = vrot.slane %v486, 4
    %v499 = vsel %vm198, %v498, %v480
    %v500 = vrot.slane %v480, 4
    %v501 = vsel %vm198, %v486, %v500
    %v503 = vunpack.c.l.s4 1934713408
    %v504 = vunpack.c.0.s8 %v503
    %v505 = vperm.slane %v499, %v504
    %v507 = vunpack.c.l.s4 1934713408
    %v508 = vunpack.c.0.s8 %v507
    %v509 = vperm.slane %v501, %v508
    %v510 = vrot.slane %v497, 4
    %v511 = vsel %vm198, %v510, %v491
    %v512 = vrot.slane %v491, 4
    %v513 = vsel %vm198, %v497, %v512
    %v515 = vunpack.c.l.s4 1934713408
    %v516 = vunpack.c.0.s8 %v515
    %v517 = vperm.slane %v511, %v516
    %v519 = vunpack.c.l.s4 1934713408
    %v520 = vunpack.c.0.s8 %v519
    %v521 = vperm.slane %v513, %v520
    %v522 = vrot.slane %v517, 4
    %v523 = vsel %vm198, %v522, %v505
    %v524 = vrot.slane %v505, 4
    %v525 = vsel %vm198, %v517, %v524
    %v526 = vrot.slane %v521, 4
    %v527 = vsel %vm198, %v526, %v509
    %v528 = vrot.slane %v509, 4
    %v529 = vsel %vm198, %v521, %v528
    %v530 = vsel %vm198, %v360, %v341
    %v532 = vunpack.c.l.s4 1983009808
    %v533 = vunpack.c.0.s8 %v532
    %v534 = vperm.slane %v530, %v533
    %v535 = vrot.slane %v361, 4
    %v536 = vsel %vm198, %v535, %v359
    %v538 = vunpack.c.l.s4 1983009808
    %v539 = vunpack.c.0.s8 %v538
    %v540 = vperm.slane %v536, %v539
    %v541 = vsel %vm198, %v364, %v353
    %v543 = vunpack.c.l.s4 1983009808
    %v544 = vunpack.c.0.s8 %v543
    %v545 = vperm.slane %v541, %v544
    %v546 = vrot.slane %v365, 4
    %v547 = vsel %vm198, %v546, %v363
    %v549 = vunpack.c.l.s4 1983009808
    %v550 = vunpack.c.0.s8 %v549
    %v551 = vperm.slane %v547, %v550
    %v552 = vrot.slane %v540, 4
    %v553 = vsel %vm198, %v552, %v534
    %v554 = vrot.slane %v534, 4
    %v555 = vsel %vm198, %v540, %v554
    %v557 = vunpack.c.l.s4 1934713408
    %v558 = vunpack.c.0.s8 %v557
    %v559 = vperm.slane %v553, %v558
    %v561 = vunpack.c.l.s4 1934713408
    %v562 = vunpack.c.0.s8 %v561
    %v563 = vperm.slane %v555, %v562
    %v564 = vrot.slane %v551, 4
    %v565 = vsel %vm198, %v564, %v545
    %v566 = vrot.slane %v545, 4
    %v567 = vsel %vm198, %v551, %v566
    %v569 = vunpack.c.l.s4 1934713408
    %v570 = vunpack.c.0.s8 %v569
    %v571 = vperm.slane %v565, %v570
    %v573 = vunpack.c.l.s4 1934713408
    %v574 = vunpack.c.0.s8 %v573
    %v575 = vperm.slane %v567, %v574
    %v576 = vrot.slane %v571, 4
    %v577 = vsel %vm198, %v576, %v559
    %v578 = vrot.slane %v559, 4
    %v579 = vsel %vm198, %v571, %v578
    %v580 = vrot.slane %v575, 4
    %v581 = vsel %vm198, %v580, %v563
    %v582 = vrot.slane %v563, 4
    %v583 = vsel %vm198, %v575, %v582
    %v584 = vsel %vm198, %v416, %v397
    %v586 = vunpack.c.l.s4 1983009808
    %v587 = vunpack.c.0.s8 %v586
    %v588 = vperm.slane %v584, %v587
    %v589 = vrot.slane %v417, 4
    %v590 = vsel %vm198, %v589, %v415
    %v592 = vunpack.c.l.s4 1983009808
    %v593 = vunpack.c.0.s8 %v592
    %v594 = vperm.slane %v590, %v593
    %v595 = vsel %vm198, %v420, %v409
    %v597 = vunpack.c.l.s4 1983009808
    %v598 = vunpack.c.0.s8 %v597
    %v599 = vperm.slane %v595, %v598
    %v600 = vrot.slane %v421, 4
    %v601 = vsel %vm198, %v600, %v419
    %v603 = vunpack.c.l.s4 1983009808
    %v604 = vunpack.c.0.s8 %v603
    %v605 = vperm.slane %v601, %v604
    %v606 = vrot.slane %v594, 4
    %v607 = vsel %vm198, %v606, %v588
    %v608 = vrot.slane %v588, 4
    %v609 = vsel %vm198, %v594, %v608
    %v611 = vunpack.c.l.s4 1934713408
    %v612 = vunpack.c.0.s8 %v611
    %v613 = vperm.slane %v607, %v612
    %v615 = vunpack.c.l.s4 1934713408
    %v616 = vunpack.c.0.s8 %v615
    %v617 = vperm.slane %v609, %v616
    %v618 = vrot.slane %v605, 4
    %v619 = vsel %vm198, %v618, %v599
    %v620 = vrot.slane %v599, 4
    %v621 = vsel %vm198, %v605, %v620
    %v623 = vunpack.c.l.s4 1934713408
    %v624 = vunpack.c.0.s8 %v623
    %v625 = vperm.slane %v619, %v624
    %v627 = vunpack.c.l.s4 1934713408
    %v628 = vunpack.c.0.s8 %v627
    %v629 = vperm.slane %v621, %v628
    %v630 = vrot.slane %v625, 4
    %v631 = vsel %vm198, %v630, %v613
    %v632 = vrot.slane %v613, 4
    %v633 = vsel %vm198, %v625, %v632
    %v634 = vrot.slane %v629, 4
    %v635 = vsel %vm198, %v634, %v617
    %v636 = vrot.slane %v617, 4
    %v637 = vsel %vm198, %v629, %v636
    %v638 = vpack.c.bf16 %v469, %v469
    %v639 = vpack.c.bf16 %v523, %v523
    %v640 = vpack.c.bf16 %v471, %v471
    %v641 = vpack.c.bf16 %v525, %v525
    %v642 = vpack.c.bf16 %v473, %v473
    %v643 = vpack.c.bf16 %v527, %v527
    %v644 = vpack.c.bf16 %v475, %v475
    %v645 = vpack.c.bf16 %v529, %v529
    %v646 = vpack.c.bf16 %v577, %v577
    %v647 = vpack.c.bf16 %v631, %v631
    %v648 = vpack.c.bf16 %v579, %v579
    %v649 = vpack.c.bf16 %v633, %v633
    %v650 = vpack.c.bf16 %v581, %v581
    %v651 = vpack.c.bf16 %v635, %v635
    %v652 = vpack.c.bf16 %v583, %v583
    %v653 = vpack.c.bf16 %v637, %v637
    %v654 = vperm.slane %v145, 0
    %v655 = vlaneseq
    %v656 = vshrl.u32 %v655, 7
    %658 = vset.pattern.permute.xlu0 %v656
    %659 = vperm.xlu0 %658, %v654
    %v660 = vpop.permute.xlu0 %659
    %v661 = vlaneseq
    %v662 = vshrl.u32 %v661, 7
    %v663 = vadd.s32 %v662, 8
    %664 = vset.pattern.permute.xlu0 %v663
    %665 = vperm.xlu0 %664, %v654
    %v666 = vpop.permute.xlu0 %665
    %v667 = vperm.slane %v145, 1
    %v668 = vlaneseq
    %v669 = vshrl.u32 %v668, 7
    %671 = vset.pattern.permute.xlu0 %v669
    %672 = vperm.xlu0 %671, %v667
    %v673 = vpop.permute.xlu0 %672
    %v674 = vlaneseq
    %v675 = vshrl.u32 %v674, 7
    %v676 = vadd.s32 %v675, 8
    %677 = vset.pattern.permute.xlu0 %v676
    %678 = vperm.xlu0 %677, %v667
    %v679 = vpop.permute.xlu0 %678
    %v680 = vperm.slane %v145, 2
    %v681 = vlaneseq
    %v682 = vshrl.u32 %v681, 7
    %684 = vset.pattern.permute.xlu0 %v682
    %685 = vperm.xlu0 %684, %v680
    %v686 = vpop.permute.xlu0 %685
    %v687 = vlaneseq
    %v688 = vshrl.u32 %v687, 7
    %v689 = vadd.s32 %v688, 8
    %690 = vset.pattern.permute.xlu0 %v689
    %691 = vperm.xlu0 %690, %v680
    %v692 = vpop.permute.xlu0 %691
    %v693 = vperm.slane %v145, 3
    %v694 = vlaneseq
    %v695 = vshrl.u32 %v694, 7
    %697 = vset.pattern.permute.xlu0 %v695
    %698 = vperm.xlu0 %697, %v693
    %v699 = vpop.permute.xlu0 %698
    %v700 = vlaneseq
    %v701 = vshrl.u32 %v700, 7
    %v702 = vadd.s32 %v701, 8
    %703 = vset.pattern.permute.xlu0 %v702
    %704 = vperm.xlu0 %703, %v693
    %v705 = vpop.permute.xlu0 %704
    %707 = vst [vmem:[#allocation1] sm:$0xff] %v145
    %s708 = scalar_lea.vmem [#allocation1], 4
    %v709 = vld [vmem:[%s708] ss:$9 sm:$0xff]
    %s710 = scalar_lea.vmem [#allocation1], 5
    %v711 = vld [vmem:[%s710] ss:$9 sm:$0xff]
    %s712 = scalar_lea.vmem [#allocation1], 6
    %v713 = vld [vmem:[%s712] ss:$9 sm:$0xff]
    %s714 = scalar_lea.vmem [#allocation1], 7
    %v715 = vld [vmem:[%s714] ss:$9 sm:$0xff]
    %v716 = vperm.slane %v709, 0
    %v717 = vperm.slane %v711, 0
    %v718 = vperm.slane %v713, 0
    %v719 = vperm.slane %v715, 0
    %v724 = vadd.f32 %v660, %v716
    %v725 = vadd.f32 %v666, %v716
    %v726 = vadd.f32 %v673, %v717
    %v727 = vadd.f32 %v679, %v717
    %v728 = vadd.f32 %v686, %v718
    %v729 = vadd.f32 %v692, %v718
    %v730 = vadd.f32 %v699, %v719
    %v731 = vadd.f32 %v705, %v719
    %vm732 = vcmp.ge.f32.partialorder %v724, 0.0
    %vm733 = vcmp.ge.f32.partialorder %v725, 0.0
    %vm734 = vcmp.ge.f32.partialorder %v726, 0.0
    %vm735 = vcmp.ge.f32.partialorder %v727, 0.0
    %vm736 = vcmp.ge.f32.partialorder %v728, 0.0
    %vm737 = vcmp.ge.f32.partialorder %v729, 0.0
    %vm738 = vcmp.ge.f32.partialorder %v730, 0.0
    %vm739 = vcmp.ge.f32.partialorder %v731, 0.0
    %v740 = vmul.f32 %v724, 0.2
    %v741 = vmul.f32 %v725, 0.2
    %v742 = vmul.f32 %v726, 0.2
    %v743 = vmul.f32 %v727, 0.2
    %v744 = vmul.f32 %v728, 0.2
    %v745 = vmul.f32 %v729, 0.2
    %v746 = vmul.f32 %v730, 0.2
    %v747 = vmul.f32 %v731, 0.2
    %v748 = vsel %vm732, %v724, %v740
    %v749 = vsel %vm733, %v725, %v741
    %v750 = vsel %vm734, %v726, %v742
    %v751 = vsel %vm735, %v727, %v743
    %v752 = vsel %vm736, %v728, %v744
    %v753 = vsel %vm737, %v729, %v745
    %v754 = vsel %vm738, %v730, %v746
    %v755 = vsel %vm739, %v731, %v747
    %v756 = vld [vmem:[#allocation5] sm:$0xff]
    %v757 = vld [vmem:[#allocation5 + $0x8] sm:$0xff]
    %vm758 = vcmp.eq.f32.partialorder %v756, 0.0
    %vm759 = vcmp.eq.f32.partialorder %v757, 0.0
    %v760 = vsel %vm758, 1, 0
    %v761 = vsel %vm759, 1, 0
    %vm762 = vcmp.eq.s32.totalorder %v760, 1
    %vm763 = vcmp.eq.s32.totalorder %v761, 1
    %v764 = vsel %vm762, -1e+09, %v748
    %v765 = vsel %vm763, -1e+09, %v749
    %v766 = vsel %vm762, -1e+09, %v750
    %v767 = vsel %vm763, -1e+09, %v751
    %v768 = vsel %vm762, -1e+09, %v752
    %v769 = vsel %vm763, -1e+09, %v753
    %v770 = vsel %vm762, -1e+09, %v754
    %v771 = vsel %vm763, -1e+09, %v755
    %vm772 = vcmask 130048
    %v773 = vsel %vm772, %v764, -inf
    %774 = vmax.xlane.f32.xlu0 %v773
    %v775 = vpop.xlane.xlu0 %774
    %v776 = vsel %vm772, %v765, -inf
    %777 = vmax.xlane.f32.xlu0 %v776
    %v778 = vpop.xlane.xlu0 %777
    %v779 = vsel %vm772, %v766, -inf
    %780 = vmax.xlane.f32.xlu0 %v779
    %v781 = vpop.xlane.xlu0 %780
    %v782 = vsel %vm772, %v767, -inf
    %783 = vmax.xlane.f32.xlu0 %v782
    %v784 = vpop.xlane.xlu0 %783
    %v785 = vsel %vm772, %v768, -inf
    %786 = vmax.xlane.f32.xlu0 %v785
    %v787 = vpop.xlane.xlu0 %786
    %v788 = vsel %vm772, %v769, -inf
    %789 = vmax.xlane.f32.xlu0 %v788
    %v790 = vpop.xlane.xlu0 %789
    %v791 = vsel %vm772, %v770, -inf
    %792 = vmax.xlane.f32.xlu0 %v791
    %v793 = vpop.xlane.xlu0 %792
    %v794 = vsel %vm772, %v771, -inf
    %795 = vmax.xlane.f32.xlu0 %v794
    %v796 = vpop.xlane.xlu0 %795
    %v797 = vsub.f32 %v764, %v775
    %v798 = vsub.f32 %v765, %v778
    %v799 = vsub.f32 %v766, %v781
    %v800 = vsub.f32 %v767, %v784
    %v801 = vsub.f32 %v768, %v787
    %v802 = vsub.f32 %v769, %v790
    %v803 = vsub.f32 %v770, %v793
    %v804 = vsub.f32 %v771, %v796
    %v805 = vmul.f32 %v797, 1.442695
    %v806 = vpow.pop %v805
    %v807 = vmul.f32 %v798, 1.442695
    %v808 = vpow.pop %v807
    %v809 = vmul.f32 %v799, 1.442695
    %v810 = vpow.pop %v809
    %v811 = vmul.f32 %v800, 1.442695
    %v812 = vpow.pop %v811
    %v813 = vmul.f32 %v801, 1.442695
    %v814 = vpow.pop %v813
    %v815 = vmul.f32 %v802, 1.442695
    %v816 = vpow.pop %v815
    %v817 = vmul.f32 %v803, 1.442695
    %v818 = vpow.pop %v817
    %v819 = vmul.f32 %v804, 1.442695
    %v820 = vpow.pop %v819
    %v821 = vsel %vm772, %v806, 0.0
    %822 = vadd.xlane.f32.xlu0 %v821
    %v823 = vpop.xlane.xlu0 %822
    %v824 = vsel %vm772, %v808, 0.0
    %825 = vadd.xlane.f32.xlu0 %v824
    %v826 = vpop.xlane.xlu0 %825
    %v827 = vsel %vm772, %v810, 0.0
    %828 = vadd.xlane.f32.xlu0 %v827
    %v829 = vpop.xlane.xlu0 %828
    %v830 = vsel %vm772, %v812, 0.0
    %831 = vadd.xlane.f32.xlu0 %v830
    %v832 = vpop.xlane.xlu0 %831
    %v833 = vsel %vm772, %v814, 0.0
    %834 = vadd.xlane.f32.xlu0 %v833
    %v835 = vpop.xlane.xlu0 %834
    %v836 = vsel %vm772, %v816, 0.0
    %837 = vadd.xlane.f32.xlu0 %v836
    %v838 = vpop.xlane.xlu0 %837
    %v839 = vsel %vm772, %v818, 0.0
    %840 = vadd.xlane.f32.xlu0 %v839
    %v841 = vpop.xlane.xlu0 %840
    %v842 = vsel %vm772, %v820, 0.0
    %843 = vadd.xlane.f32.xlu0 %v842
    %v844 = vpop.xlane.xlu0 %843
    %v845 = vrcp.pop %v823
    %v846 = vrcp.pop %v826
    %v847 = vrcp.pop %v829
    %v848 = vrcp.pop %v832
    %v849 = vrcp.pop %v835
    %v850 = vrcp.pop %v838
    %v851 = vrcp.pop %v841
    %v852 = vrcp.pop %v844
    %v853 = vmul.f32 %v806, %v845
    %v854 = vmul.f32 %v808, %v846
    %v855 = vmul.f32 %v810, %v847
    %v856 = vmul.f32 %v812, %v848
    %v857 = vmul.f32 %v814, %v849
    %v858 = vmul.f32 %v816, %v850
    %v859 = vmul.f32 %v818, %v851
    %v860 = vmul.f32 %v820, %v852
    %v861 = vpack.c.bf16 %v853, %v853
    %v862 = vpack.c.bf16 %v854, %v854
    %v863 = vpack.c.bf16 %v855, %v855
    %v864 = vpack.c.bf16 %v856, %v856
    %v865 = vpack.c.bf16 %v857, %v857
    %v866 = vpack.c.bf16 %v858, %v858
    %v867 = vpack.c.bf16 %v859, %v859
    %v868 = vpack.c.bf16 %v860, %v860
    %v871 = vunpack.c.l.b16 %v861
    %v872 = vunpack.c.l.b16 %v862
    %v873 = vpack.c.b16 %v872, %v871
    %v876 = vunpack.c.l.b16 %v638
    %v877 = vunpack.c.l.b16 %v639
    %v878 = vpack.c.b16 %v877, %v876
    %v881 = vsel %vm772, %v873, 0
    %883 = vmatpush.bf16.msra.mxu0 0
    %884 = vmatpush.bf16.msra.mxu0 0
    %885 = vmatpush.bf16.msra.mxu0 0
    %886 = vmatpush.bf16.msra.mxu0 0
    %887 = vmatpush.bf16.msra.mxu0 0
    %888 = vmatpush.bf16.msra.mxu0 0
    %889 = vmatpush.bf16.msra.mxu0 0
    %890 = vmatpush.bf16.msra.mxu0 %v878
    %891 = vmatmul.bf16.gmra.mxu0 %v881
    %v892 = vpop.f32.mrf.mxu0
    %v893 = vadd.f32 0.0, %v892
    %v894 = vpop.f32.mrf.mxu0
    %v895 = vadd.f32 0.0, %v894
    %896 = vdwg.mxu0
    %v899 = vunpack.c.l.b16 %v863
    %v900 = vunpack.c.l.b16 %v864
    %v901 = vpack.c.b16 %v900, %v899
    %v904 = vunpack.c.l.b16 %v640
    %v905 = vunpack.c.l.b16 %v641
    %v906 = vpack.c.b16 %v905, %v904
    %v909 = vsel %vm772, %v901, 0
    %911 = vmatpush.bf16.msra.mxu0 0
    %912 = vmatpush.bf16.msra.mxu0 0
    %913 = vmatpush.bf16.msra.mxu0 0
    %914 = vmatpush.bf16.msra.mxu0 0
    %915 = vmatpush.bf16.msra.mxu0 0
    %916 = vmatpush.bf16.msra.mxu0 0
    %917 = vmatpush.bf16.msra.mxu0 0
    %918 = vmatpush.bf16.msra.mxu0 %v906
    %919 = vmatmul.bf16.gmra.mxu0 %v909
    %v920 = vpop.f32.mrf.mxu0
    %v921 = vadd.f32 0.0, %v920
    %v922 = vpop.f32.mrf.mxu0
    %v923 = vadd.f32 0.0, %v922
    %924 = vdwg.mxu0
    %v927 = vunpack.c.l.b16 %v865
    %v928 = vunpack.c.l.b16 %v866
    %v929 = vpack.c.b16 %v928, %v927
    %v932 = vunpack.c.l.b16 %v642
    %v933 = vunpack.c.l.b16 %v643
    %v934 = vpack.c.b16 %v933, %v932
    %v937 = vsel %vm772, %v929, 0
    %939 = vmatpush.bf16.msra.mxu0 0
    %940 = vmatpush.bf16.msra.mxu0 0
    %941 = vmatpush.bf16.msra.mxu0 0
    %942 = vmatpush.bf16.msra.mxu0 0
    %943 = vmatpush.bf16.msra.mxu0 0
    %944 = vmatpush.bf16.msra.mxu0 0
    %945 = vmatpush.bf16.msra.mxu0 0
    %946 = vmatpush.bf16.msra.mxu0 %v934
    %947 = vmatmul.bf16.gmra.mxu0 %v937
    %v948 = vpop.f32.mrf.mxu0
    %v949 = vadd.f32 0.0, %v948
    %v950 = vpop.f32.mrf.mxu0
    %v951 = vadd.f32 0.0, %v950
    %952 = vdwg.mxu0
    %v955 = vunpack.c.l.b16 %v867
    %v956 = vunpack.c.l.b16 %v868
    %v957 = vpack.c.b16 %v956, %v955
    %v960 = vunpack.c.l.b16 %v644
    %v961 = vunpack.c.l.b16 %v645
    %v962 = vpack.c.b16 %v961, %v960
    %v965 = vsel %vm772, %v957, 0
    %967 = vmatpush.bf16.msra.mxu0 0
    %968 = vmatpush.bf16.msra.mxu0 0
    %969 = vmatpush.bf16.msra.mxu0 0
    %970 = vmatpush.bf16.msra.mxu0 0
    %971 = vmatpush.bf16.msra.mxu0 0
    %972 = vmatpush.bf16.msra.mxu0 0
    %973 = vmatpush.bf16.msra.mxu0 0
    %974 = vmatpush.bf16.msra.mxu0 %v962
    %975 = vmatmul.bf16.gmra.mxu0 %v965
    %v976 = vpop.f32.mrf.mxu0
    %v977 = vadd.f32 0.0, %v976
    %v978 = vpop.f32.mrf.mxu0
    %v979 = vadd.f32 0.0, %v978
    %980 = vdwg.mxu0
    %v981 = vxor.u32 %v893, 2147483648
    %v982 = vxor.u32 %v895, 2147483648
    %v983 = vxor.u32 %v921, 2147483648
    %v984 = vxor.u32 %v923, 2147483648
    %v985 = vxor.u32 %v949, 2147483648
    %v986 = vxor.u32 %v951, 2147483648
    %v987 = vxor.u32 %v977, 2147483648
    %v988 = vxor.u32 %v979, 2147483648
    %v989 = vmul.f32 %v981, 1.442695
    %v990 = vpow.pop %v989
    %v991 = vmul.f32 %v982, 1.442695
    %v992 = vpow.pop %v991
    %v993 = vmul.f32 %v983, 1.442695
    %v994 = vpow.pop %v993
    %v995 = vmul.f32 %v984, 1.442695
    %v996 = vpow.pop %v995
    %v997 = vmul.f32 %v985, 1.442695
    %v998 = vpow.pop %v997
    %v999 = vmul.f32 %v986, 1.442695
    %v1000 = vpow.pop %v999
    %v1001 = vmul.f32 %v987, 1.442695
    %v1002 = vpow.pop %v1001
    %v1003 = vmul.f32 %v988, 1.442695
    %v1004 = vpow.pop %v1003
    %v1005 = vadd.f32 %v990, 1.0
    %v1006 = vadd.f32 %v992, 1.0
    %v1007 = vadd.f32 %v994, 1.0
    %v1008 = vadd.f32 %v996, 1.0
    %v1009 = vadd.f32 %v998, 1.0
    %v1010 = vadd.f32 %v1000, 1.0
    %v1011 = vadd.f32 %v1002, 1.0
    %v1012 = vadd.f32 %v1004, 1.0
    %v1013 = vrcp.pop %v1005
    %v1014 = vmul.f32 %v1005, %v1013
    %v1015 = vsub.f32 1.0, %v1014
    %v1016 = vmul.f32 %v1013, %v1015
    %v1017 = vadd.f32 %v1013, %v1016
    %vm1018 = vweird.f32 %v1005
    %vm1019 = vweird.f32 %v1013
    %vm1020 = vmor %vm1018, %vm1019
    %v1021 = vsel %vm1020, %v1013, %v1017
    %v1022 = vand.u32 2147483647, %v1005
    %vm1023 = vcmp.eq.f32.partialorder %v1022, 8.507059e+37
    %v1024 = vand.u32 %v1005, 2147483648
    %v1025 = vor.u32 1.1754944e-38, %v1024
    %v1026 = vsel %vm1023, %v1025, %v1021
    %v1027 = vmul.f32 1.0, %v1026
    %v1028 = vrcp.pop %v1006
    %v1029 = vmul.f32 %v1006, %v1028
    %v1030 = vsub.f32 1.0, %v1029
    %v1031 = vmul.f32 %v1028, %v1030
    %v1032 = vadd.f32 %v1028, %v1031
    %vm1033 = vweird.f32 %v1006
    %vm1034 = vweird.f32 %v1028
    %vm1035 = vmor %vm1033, %vm1034
    %v1036 = vsel %vm1035, %v1028, %v1032
    %v1037 = vand.u32 2147483647, %v1006
    %vm1038 = vcmp.eq.f32.partialorder %v1037, 8.507059e+37
    %v1039 = vand.u32 %v1006, 2147483648
    %v1040 = vor.u32 1.1754944e-38, %v1039
    %v1041 = vsel %vm1038, %v1040, %v1036
    %v1042 = vmul.f32 1.0, %v1041
    %v1043 = vrcp.pop %v1007
    %v1044 = vmul.f32 %v1007, %v1043
    %v1045 = vsub.f32 1.0, %v1044
    %v1046 = vmul.f32 %v1043, %v1045
    %v1047 = vadd.f32 %v1043, %v1046
    %vm1048 = vweird.f32 %v1007
    %vm1049 = vweird.f32 %v1043
    %vm1050 = vmor %vm1048, %vm1049
    %v1051 = vsel %vm1050, %v1043, %v1047
    %v1052 = vand.u32 2147483647, %v1007
    %vm1053 = vcmp.eq.f32.partialorder %v1052, 8.507059e+37
    %v1054 = vand.u32 %v1007, 2147483648
    %v1055 = vor.u32 1.1754944e-38, %v1054
    %v1056 = vsel %vm1053, %v1055, %v1051
    %v1057 = vmul.f32 1.0, %v1056
    %v1058 = vrcp.pop %v1008
    %v1059 = vmul.f32 %v1008, %v1058
    %v1060 = vsub.f32 1.0, %v1059
    %v1061 = vmul.f32 %v1058, %v1060
    %v1062 = vadd.f32 %v1058, %v1061
    %vm1063 = vweird.f32 %v1008
    %vm1064 = vweird.f32 %v1058
    %vm1065 = vmor %vm1063, %vm1064
    %v1066 = vsel %vm1065, %v1058, %v1062
    %v1067 = vand.u32 2147483647, %v1008
    %vm1068 = vcmp.eq.f32.partialorder %v1067, 8.507059e+37
    %v1069 = vand.u32 %v1008, 2147483648
    %v1070 = vor.u32 1.1754944e-38, %v1069
    %v1071 = vsel %vm1068, %v1070, %v1066
    %v1072 = vmul.f32 1.0, %v1071
    %v1073 = vrcp.pop %v1009
    %v1074 = vmul.f32 %v1009, %v1073
    %v1075 = vsub.f32 1.0, %v1074
    %v1076 = vmul.f32 %v1073, %v1075
    %v1077 = vadd.f32 %v1073, %v1076
    %vm1078 = vweird.f32 %v1009
    %vm1079 = vweird.f32 %v1073
    %vm1080 = vmor %vm1078, %vm1079
    %v1081 = vsel %vm1080, %v1073, %v1077
    %v1082 = vand.u32 2147483647, %v1009
    %vm1083 = vcmp.eq.f32.partialorder %v1082, 8.507059e+37
    %v1084 = vand.u32 %v1009, 2147483648
    %v1085 = vor.u32 1.1754944e-38, %v1084
    %v1086 = vsel %vm1083, %v1085, %v1081
    %v1087 = vmul.f32 1.0, %v1086
    %v1088 = vrcp.pop %v1010
    %v1089 = vmul.f32 %v1010, %v1088
    %v1090 = vsub.f32 1.0, %v1089
    %v1091 = vmul.f32 %v1088, %v1090
    %v1092 = vadd.f32 %v1088, %v1091
    %vm1093 = vweird.f32 %v1010
    %vm1094 = vweird.f32 %v1088
    %vm1095 = vmor %vm1093, %vm1094
    %v1096 = vsel %vm1095, %v1088, %v1092
    %v1097 = vand.u32 2147483647, %v1010
    %vm1098 = vcmp.eq.f32.partialorder %v1097, 8.507059e+37
    %v1099 = vand.u32 %v1010, 2147483648
    %v1100 = vor.u32 1.1754944e-38, %v1099
    %v1101 = vsel %vm1098, %v1100, %v1096
    %v1102 = vmul.f32 1.0, %v1101
    %v1103 = vrcp.pop %v1011
    %v1104 = vmul.f32 %v1011, %v1103
    %v1105 = vsub.f32 1.0, %v1104
    %v1106 = vmul.f32 %v1103, %v1105
    %v1107 = vadd.f32 %v1103, %v1106
    %vm1108 = vweird.f32 %v1011
    %vm1109 = vweird.f32 %v1103
    %vm1110 = vmor %vm1108, %vm1109
    %v1111 = vsel %vm1110, %v1103, %v1107
    %v1112 = vand.u32 2147483647, %v1011
    %vm1113 = vcmp.eq.f32.partialorder %v1112, 8.507059e+37
    %v1114 = vand.u32 %v1011, 2147483648
    %v1115 = vor.u32 1.1754944e-38, %v1114
    %v1116 = vsel %vm1113, %v1115, %v1111
    %v1117 = vmul.f32 1.0, %v1116
    %v1118 = vrcp.pop %v1012
    %v1119 = vmul.f32 %v1012, %v1118
    %v1120 = vsub.f32 1.0, %v1119
    %v1121 = vmul.f32 %v1118, %v1120
    %v1122 = vadd.f32 %v1118, %v1121
    %vm1123 = vweird.f32 %v1012
    %vm1124 = vweird.f32 %v1118
    %vm1125 = vmor %vm1123, %vm1124
    %v1126 = vsel %vm1125, %v1118, %v1122
    %v1127 = vand.u32 2147483647, %v1012
    %vm1128 = vcmp.eq.f32.partialorder %v1127, 8.507059e+37
    %v1129 = vand.u32 %v1012, 2147483648
    %v1130 = vor.u32 1.1754944e-38, %v1129
    %v1131 = vsel %vm1128, %v1130, %v1126
    %v1132 = vmul.f32 1.0, %v1131
    %v1133 = vrot.slane %v1087, 4
    %v1134 = vsel %vm198, %v1133, %v1027
    %v1135 = vrot.slane %v1027, 4
    %v1136 = vsel %vm198, %v1087, %v1135
    %v1138 = vunpack.c.l.s4 1983009808
    %v1139 = vunpack.c.0.s8 %v1138
    %v1140 = vperm.slane %v1134, %v1139
    %v1142 = vunpack.c.l.s4 1983009808
    %v1143 = vunpack.c.0.s8 %v1142
    %v1144 = vperm.slane %v1136, %v1143
    %v1145 = vrot.slane %v1117, 4
    %v1146 = vsel %vm198, %v1145, %v1057
    %v1147 = vrot.slane %v1057, 4
    %v1148 = vsel %vm198, %v1117, %v1147
    %v1150 = vunpack.c.l.s4 1983009808
    %v1151 = vunpack.c.0.s8 %v1150
    %v1152 = vperm.slane %v1146, %v1151
    %v1154 = vunpack.c.l.s4 1983009808
    %v1155 = vunpack.c.0.s8 %v1154
    %v1156 = vperm.slane %v1148, %v1155
    %v1157 = vrot.slane %v1152, 4
    %v1158 = vsel %vm198, %v1157, %v1140
    %v1159 = vrot.slane %v1140, 4
    %v1160 = vsel %vm198, %v1152, %v1159
    %v1162 = vunpack.c.l.s4 1934713408
    %v1163 = vunpack.c.0.s8 %v1162
    %v1164 = vperm.slane %v1158, %v1163
    %v1166 = vunpack.c.l.s4 1934713408
    %v1167 = vunpack.c.0.s8 %v1166
    %v1168 = vperm.slane %v1160, %v1167
    %v1169 = vrot.slane %v1156, 4
    %v1170 = vsel %vm198, %v1169, %v1144
    %v1171 = vrot.slane %v1144, 4
    %v1172 = vsel %vm198, %v1156, %v1171
    %v1174 = vunpack.c.l.s4 1934713408
    %v1175 = vunpack.c.0.s8 %v1174
    %v1176 = vperm.slane %v1170, %v1175
    %v1178 = vunpack.c.l.s4 1934713408
    %v1179 = vunpack.c.0.s8 %v1178
    %v1180 = vperm.slane %v1172, %v1179
    %v1181 = vrot.slane %v1164, 4
    %v1182 = vsel %vm198, 0.0, %v1181
    %v1183 = vrot.slane %v1168, 4
    %v1184 = vsel %vm198, 0.0, %v1183
    %v1185 = vrot.slane %v1176, 4
    %v1186 = vsel %vm198, 0.0, %v1185
    %v1187 = vrot.slane %v1180, 4
    %v1188 = vsel %vm198, 0.0, %v1187
    %v1189 = vrot.slane %v1102, 4
    %v1190 = vsel %vm198, %v1189, %v1042
    %v1191 = vrot.slane %v1042, 4
    %v1192 = vsel %vm198, %v1102, %v1191
    %v1194 = vunpack.c.l.s4 1983009808
    %v1195 = vunpack.c.0.s8 %v1194
    %v1196 = vperm.slane %v1190, %v1195
    %v1198 = vunpack.c.l.s4 1983009808
    %v1199 = vunpack.c.0.s8 %v1198
    %v1200 = vperm.slane %v1192, %v1199
    %v1201 = vrot.slane %v1132, 4
    %v1202 = vsel %vm198, %v1201, %v1072
    %v1203 = vrot.slane %v1072, 4
    %v1204 = vsel %vm198, %v1132, %v1203
    %v1206 = vunpack.c.l.s4 1983009808
    %v1207 = vunpack.c.0.s8 %v1206
    %v1208 = vperm.slane %v1202, %v1207
    %v1210 = vunpack.c.l.s4 1983009808
    %v1211 = vunpack.c.0.s8 %v1210
    %v1212 = vperm.slane %v1204, %v1211
    %v1213 = vrot.slane %v1208, 4
    %v1214 = vsel %vm198, %v1213, %v1196
    %v1215 = vrot.slane %v1196, 4
    %v1216 = vsel %vm198, %v1208, %v1215
    %v1218 = vunpack.c.l.s4 1934713408
    %v1219 = vunpack.c.0.s8 %v1218
    %v1220 = vperm.slane %v1214, %v1219
    %v1222 = vunpack.c.l.s4 1934713408
    %v1223 = vunpack.c.0.s8 %v1222
    %v1224 = vperm.slane %v1216, %v1223
    %v1225 = vrot.slane %v1212, 4
    %v1226 = vsel %vm198, %v1225, %v1200
    %v1227 = vrot.slane %v1200, 4
    %v1228 = vsel %vm198, %v1212, %v1227
    %v1230 = vunpack.c.l.s4 1934713408
    %v1231 = vunpack.c.0.s8 %v1230
    %v1232 = vperm.slane %v1226, %v1231
    %v1234 = vunpack.c.l.s4 1934713408
    %v1235 = vunpack.c.0.s8 %v1234
    %v1236 = vperm.slane %v1228, %v1235
    %v1237 = vrot.slane %v1220, 4
    %v1238 = vsel %vm198, 0.0, %v1237
    %v1239 = vrot.slane %v1224, 4
    %v1240 = vsel %vm198, 0.0, %v1239
    %v1241 = vrot.slane %v1232, 4
    %v1242 = vsel %vm198, 0.0, %v1241
    %v1243 = vrot.slane %v1236, 4
    %v1244 = vsel %vm198, 0.0, %v1243
    %1246 = vrot.lane.b32.xlu0 %v1182, 16
    %v1247 = vpop.permute.xlu0 %1246
    %1250 = vrot.lane.b32.xlu0 %v1168, 32
    %v1251 = vpop.permute.xlu0 %1250
    %1254 = vrot.lane.b32.xlu0 %v1184, 48
    %v1255 = vpop.permute.xlu0 %1254
    %1258 = vrot.lane.b32.xlu0 %v1176, 64
    %v1259 = vpop.permute.xlu0 %1258
    %1262 = vrot.lane.b32.xlu0 %v1186, 80
    %v1263 = vpop.permute.xlu0 %1262
    %1266 = vrot.lane.b32.xlu0 %v1180, 96
    %v1267 = vpop.permute.xlu0 %1266
    %1270 = vrot.lane.b32.xlu0 %v1188, 112
    %v1271 = vpop.permute.xlu0 %1270
    %1274 = vrot.lane.b32.xlu0 %v1238, 16
    %v1275 = vpop.permute.xlu0 %1274
    %1278 = vrot.lane.b32.xlu0 %v1224, 32
    %v1279 = vpop.permute.xlu0 %1278
    %1282 = vrot.lane.b32.xlu0 %v1240, 48
    %v1283 = vpop.permute.xlu0 %1282
    %1286 = vrot.lane.b32.xlu0 %v1232, 64
    %v1287 = vpop.permute.xlu0 %1286
    %1290 = vrot.lane.b32.xlu0 %v1242, 80
    %v1291 = vpop.permute.xlu0 %1290
    %1294 = vrot.lane.b32.xlu0 %v1236, 96
    %v1295 = vpop.permute.xlu0 %1294
    %1298 = vrot.lane.b32.xlu0 %v1244, 112
    %v1299 = vpop.permute.xlu0 %1298
    %v1301 = vsel %vm772, %v1164, %v1247
    %v1302 = vsel %vm71, %v1301, %v1251
    %vm1303 = vcmask 392192
    %v1304 = vsel %vm1303, %v1302, %v1255
    %vm1305 = vcmask 523264
    %v1306 = vsel %vm1305, %v1304, %v1259
    %vm1307 = vcmask 654336
    %v1308 = vsel %vm1307, %v1306, %v1263
    %vm1309 = vcmask 785408
    %v1310 = vsel %vm1309, %v1308, %v1267
    %vm1311 = vcmask 916480
    %v1312 = vsel %vm1311, %v1310, %v1271
    %v1313 = vsel %vm772, %v1220, %v1275
    %v1314 = vsel %vm71, %v1313, %v1279
    %v1315 = vsel %vm1303, %v1314, %v1283
    %v1316 = vsel %vm1305, %v1315, %v1287
    %v1317 = vsel %vm1307, %v1316, %v1291
    %v1318 = vsel %vm1309, %v1317, %v1295
    %v1319 = vsel %vm1311, %v1318, %v1299
    %v1322 = vrot.slane %v1319, 4
    %vm1323 = vcmask 1043456
    %v1324 = vsel %vm1323, %v1312, %v1322
    %1326 = vst [vmem:[#allocation8] sm:$0xff] %v1324
    %v1327 = vlaneseq
    %v1328 = vshrl.u32 %v1327, 7
    %v1329 = vadd.s32 %v1328, 16
    %1330 = vset.pattern.permute.xlu0 %v1329
    %1331 = vperm.xlu0 %1330, %v654
    %v1332 = vpop.permute.xlu0 %1331
    %v1333 = vlaneseq
    %v1334 = vshrl.u32 %v1333, 7
    %v1335 = vadd.s32 %v1334, 24
    %1336 = vset.pattern.permute.xlu0 %v1335
    %1337 = vperm.xlu0 %1336, %v654
    %v1338 = vpop.permute.xlu0 %1337
    %v1339 = vlaneseq
    %v1340 = vshrl.u32 %v1339, 7
    %v1341 = vadd.s32 %v1340, 16
    %1342 = vset.pattern.permute.xlu0 %v1341
    %1343 = vperm.xlu0 %1342, %v667
    %v1344 = vpop.permute.xlu0 %1343
    %v1345 = vlaneseq
    %v1346 = vshrl.u32 %v1345, 7
    %v1347 = vadd.s32 %v1346, 24
    %1348 = vset.pattern.permute.xlu0 %v1347
    %1349 = vperm.xlu0 %1348, %v667
    %v1350 = vpop.permute.xlu0 %1349
    %v1351 = vlaneseq
    %v1352 = vshrl.u32 %v1351, 7
    %v1353 = vadd.s32 %v1352, 16
    %1354 = vset.pattern.permute.xlu0 %v1353
    %1355 = vperm.xlu0 %1354, %v680
    %v1356 = vpop.permute.xlu0 %1355
    %v1357 = vlaneseq
    %v1358 = vshrl.u32 %v1357, 7
    %v1359 = vadd.s32 %v1358, 24
    %1360 = vset.pattern.permute.xlu0 %v1359
    %1361 = vperm.xlu0 %1360, %v680
    %v1362 = vpop.permute.xlu0 %1361
    %v1363 = vlaneseq
    %v1364 = vshrl.u32 %v1363, 7
    %v1365 = vadd.s32 %v1364, 16
    %1366 = vset.pattern.permute.xlu0 %v1365
    %1367 = vperm.xlu0 %1366, %v693
    %v1368 = vpop.permute.xlu0 %1367
    %v1369 = vlaneseq
    %v1370 = vshrl.u32 %v1369, 7
    %v1371 = vadd.s32 %v1370, 24
    %1372 = vset.pattern.permute.xlu0 %v1371
    %1373 = vperm.xlu0 %1372, %v693
    %v1374 = vpop.permute.xlu0 %1373
    %1375 = vst [vmem:[#allocation1] sm:$0xff] %v145
    %s1376 = scalar_lea.vmem [#allocation1], 4
    %v1377 = vld [vmem:[%s1376] ss:$9 sm:$0xff]
    %s1378 = scalar_lea.vmem [#allocation1], 5
    %v1379 = vld [vmem:[%s1378] ss:$9 sm:$0xff]
    %s1380 = scalar_lea.vmem [#allocation1], 6
    %v1381 = vld [vmem:[%s1380] ss:$9 sm:$0xff]
    %s1382 = scalar_lea.vmem [#allocation1], 7
    %v1383 = vld [vmem:[%s1382] ss:$9 sm:$0xff]
    %v1384 = vperm.slane %v1377, 0
    %v1385 = vperm.slane %v1379, 0
    %v1386 = vperm.slane %v1381, 0
    %v1387 = vperm.slane %v1383, 0
    %v1392 = vadd.f32 %v1332, %v1384
    %v1393 = vadd.f32 %v1338, %v1384
    %v1394 = vadd.f32 %v1344, %v1385
    %v1395 = vadd.f32 %v1350, %v1385
    %v1396 = vadd.f32 %v1356, %v1386
    %v1397 = vadd.f32 %v1362, %v1386
    %v1398 = vadd.f32 %v1368, %v1387
    %v1399 = vadd.f32 %v1374, %v1387
    %vm1400 = vcmp.ge.f32.partialorder %v1392, 0.0
    %vm1401 = vcmp.ge.f32.partialorder %v1393, 0.0
    %vm1402 = vcmp.ge.f32.partialorder %v1394, 0.0
    %vm1403 = vcmp.ge.f32.partialorder %v1395, 0.0
    %vm1404 = vcmp.ge.f32.partialorder %v1396, 0.0
    %vm1405 = vcmp.ge.f32.partialorder %v1397, 0.0
    %vm1406 = vcmp.ge.f32.partialorder %v1398, 0.0
    %vm1407 = vcmp.ge.f32.partialorder %v1399, 0.0
    %v1408 = vmul.f32 %v1392, 0.2
    %v1409 = vmul.f32 %v1393, 0.2
    %v1410 = vmul.f32 %v1394, 0.2
    %v1411 = vmul.f32 %v1395, 0.2
    %v1412 = vmul.f32 %v1396, 0.2
    %v1413 = vmul.f32 %v1397, 0.2
    %v1414 = vmul.f32 %v1398, 0.2
    %v1415 = vmul.f32 %v1399, 0.2
    %v1416 = vsel %vm1400, %v1392, %v1408
    %v1417 = vsel %vm1401, %v1393, %v1409
    %v1418 = vsel %vm1402, %v1394, %v1410
    %v1419 = vsel %vm1403, %v1395, %v1411
    %v1420 = vsel %vm1404, %v1396, %v1412
    %v1421 = vsel %vm1405, %v1397, %v1413
    %v1422 = vsel %vm1406, %v1398, %v1414
    %v1423 = vsel %vm1407, %v1399, %v1415
    %s1424 = scalar_lea.vmem [#allocation5], 16
    %v1425 = vld [vmem:[%s1424] sm:$0xff]
    %v1426 = vld [vmem:[%s1424 + $0x8] sm:$0xff]
    %vm1427 = vcmp.eq.f32.partialorder %v1425, 0.0
    %vm1428 = vcmp.eq.f32.partialorder %v1426, 0.0
    %v1429 = vsel %vm1427, 1, 0
    %v1430 = vsel %vm1428, 1, 0
    %vm1431 = vcmp.eq.s32.totalorder %v1429, 1
    %vm1432 = vcmp.eq.s32.totalorder %v1430, 1
    %1441 = vrot.lane.b32.xlu0 %v1416, 112
    %v1442 = vpop.permute.xlu0 %1441
    %1443 = vrot.lane.b32.xlu0 %v1417, 112
    %v1444 = vpop.permute.xlu0 %1443
    %1445 = vrot.lane.b32.xlu0 %v1418, 112
    %v1446 = vpop.permute.xlu0 %1445
    %1447 = vrot.lane.b32.xlu0 %v1419, 112
    %v1448 = vpop.permute.xlu0 %1447
    %1449 = vrot.lane.b32.xlu0 %v1420, 112
    %v1450 = vpop.permute.xlu0 %1449
    %1451 = vrot.lane.b32.xlu0 %v1421, 112
    %v1452 = vpop.permute.xlu0 %1451
    %1453 = vrot.lane.b32.xlu0 %v1422, 112
    %v1454 = vpop.permute.xlu0 %1453
    %1455 = vrot.lane.b32.xlu0 %v1423, 112
    %v1456 = vpop.permute.xlu0 %1455
    %v1465 = vsel %vm1431, -1e+09, %v1442
    %v1466 = vsel %vm1432, -1e+09, %v1444
    %v1467 = vsel %vm1431, -1e+09, %v1446
    %v1468 = vsel %vm1432, -1e+09, %v1448
    %v1469 = vsel %vm1431, -1e+09, %v1450
    %v1470 = vsel %vm1432, -1e+09, %v1452
    %v1471 = vsel %vm1431, -1e+09, %v1454
    %v1472 = vsel %vm1432, -1e+09, %v1456
    %v1473 = vsel %vm772, %v1465, -inf
    %1474 = vmax.xlane.f32.xlu0 %v1473
    %v1475 = vpop.xlane.xlu0 %1474
    %v1476 = vsel %vm772, %v1466, -inf
    %1477 = vmax.xlane.f32.xlu0 %v1476
    %v1478 = vpop.xlane.xlu0 %1477
    %v1479 = vsel %vm772, %v1467, -inf
    %1480 = vmax.xlane.f32.xlu0 %v1479
    %v1481 = vpop.xlane.xlu0 %1480
    %v1482 = vsel %vm772, %v1468, -inf
    %1483 = vmax.xlane.f32.xlu0 %v1482
    %v1484 = vpop.xlane.xlu0 %1483
    %v1485 = vsel %vm772, %v1469, -inf
    %1486 = vmax.xlane.f32.xlu0 %v1485
    %v1487 = vpop.xlane.xlu0 %1486
    %v1488 = vsel %vm772, %v1470, -inf
    %1489 = vmax.xlane.f32.xlu0 %v1488
    %v1490 = vpop.xlane.xlu0 %1489
    %v1491 = vsel %vm772, %v1471, -inf
    %1492 = vmax.xlane.f32.xlu0 %v1491
    %v1493 = vpop.xlane.xlu0 %1492
    %v1494 = vsel %vm772, %v1472, -inf
    %1495 = vmax.xlane.f32.xlu0 %v1494
    %v1496 = vpop.xlane.xlu0 %1495
    %v1497 = vsub.f32 %v1465, %v1475
    %v1498 = vsub.f32 %v1466, %v1478
    %v1499 = vsub.f32 %v1467, %v1481
    %v1500 = vsub.f32 %v1468, %v1484
    %v1501 = vsub.f32 %v1469, %v1487
    %v1502 = vsub.f32 %v1470, %v1490
    %v1503 = vsub.f32 %v1471, %v1493
    %v1504 = vsub.f32 %v1472, %v1496
    %v1505 = vmul.f32 %v1497, 1.442695
    %v1506 = vpow.pop %v1505
    %v1507 = vmul.f32 %v1498, 1.442695
    %v1508 = vpow.pop %v1507
    %v1509 = vmul.f32 %v1499, 1.442695
    %v1510 = vpow.pop %v1509
    %v1511 = vmul.f32 %v1500, 1.442695
    %v1512 = vpow.pop %v1511
    %v1513 = vmul.f32 %v1501, 1.442695
    %v1514 = vpow.pop %v1513
    %v1515 = vmul.f32 %v1502, 1.442695
    %v1516 = vpow.pop %v1515
    %v1517 = vmul.f32 %v1503, 1.442695
    %v1518 = vpow.pop %v1517
    %v1519 = vmul.f32 %v1504, 1.442695
    %v1520 = vpow.pop %v1519
    %v1521 = vsel %vm772, %v1506, 0.0
    %1522 = vadd.xlane.f32.xlu0 %v1521
    %v1523 = vpop.xlane.xlu0 %1522
    %v1524 = vsel %vm772, %v1508, 0.0
    %1525 = vadd.xlane.f32.xlu0 %v1524
    %v1526 = vpop.xlane.xlu0 %1525
    %v1527 = vsel %vm772, %v1510, 0.0
    %1528 = vadd.xlane.f32.xlu0 %v1527
    %v1529 = vpop.xlane.xlu0 %1528
    %v1530 = vsel %vm772, %v1512, 0.0
    %1531 = vadd.xlane.f32.xlu0 %v1530
    %v1532 = vpop.xlane.xlu0 %1531
    %v1533 = vsel %vm772, %v1514, 0.0
    %1534 = vadd.xlane.f32.xlu0 %v1533
    %v1535 = vpop.xlane.xlu0 %1534
    %v1536 = vsel %vm772, %v1516, 0.0
    %1537 = vadd.xlane.f32.xlu0 %v1536
    %v1538 = vpop.xlane.xlu0 %1537
    %v1539 = vsel %vm772, %v1518, 0.0
    %1540 = vadd.xlane.f32.xlu0 %v1539
    %v1541 = vpop.xlane.xlu0 %1540
    %v1542 = vsel %vm772, %v1520, 0.0
    %1543 = vadd.xlane.f32.xlu0 %v1542
    %v1544 = vpop.xlane.xlu0 %1543
    %v1545 = vrcp.pop %v1523
    %v1546 = vrcp.pop %v1526
    %v1547 = vrcp.pop %v1529
    %v1548 = vrcp.pop %v1532
    %v1549 = vrcp.pop %v1535
    %v1550 = vrcp.pop %v1538
    %v1551 = vrcp.pop %v1541
    %v1552 = vrcp.pop %v1544
    %v1553 = vmul.f32 %v1506, %v1545
    %v1554 = vmul.f32 %v1508, %v1546
    %v1555 = vmul.f32 %v1510, %v1547
    %v1556 = vmul.f32 %v1512, %v1548
    %v1557 = vmul.f32 %v1514, %v1549
    %v1558 = vmul.f32 %v1516, %v1550
    %v1559 = vmul.f32 %v1518, %v1551
    %v1560 = vmul.f32 %v1520, %v1552
    %v1561 = vpack.c.bf16 %v1553, %v1553
    %v1562 = vpack.c.bf16 %v1554, %v1554
    %v1563 = vpack.c.bf16 %v1555, %v1555
    %v1564 = vpack.c.bf16 %v1556, %v1556
    %v1565 = vpack.c.bf16 %v1557, %v1557
    %v1566 = vpack.c.bf16 %v1558, %v1558
    %v1567 = vpack.c.bf16 %v1559, %v1559
    %v1568 = vpack.c.bf16 %v1560, %v1560
    %v1571 = vunpack.c.l.b16 %v1561
    %v1572 = vunpack.c.l.b16 %v1562
    %v1573 = vpack.c.b16 %v1572, %v1571
    %v1576 = vunpack.c.l.b16 %v646
    %v1577 = vunpack.c.l.b16 %v647
    %v1578 = vpack.c.b16 %v1577, %v1576
    %v1581 = vsel %vm772, %v1573, 0
    %1583 = vmatpush.bf16.msra.mxu0 0
    %1584 = vmatpush.bf16.msra.mxu0 0
    %1585 = vmatpush.bf16.msra.mxu0 0
    %1586 = vmatpush.bf16.msra.mxu0 0
    %1587 = vmatpush.bf16.msra.mxu0 0
    %1588 = vmatpush.bf16.msra.mxu0 0
    %1589 = vmatpush.bf16.msra.mxu0 0
    %1590 = vmatpush.bf16.msra.mxu0 %v1578
    %1591 = vmatmul.bf16.gmra.mxu0 %v1581
    %v1592 = vpop.f32.mrf.mxu0
    %v1593 = vadd.f32 0.0, %v1592
    %v1594 = vpop.f32.mrf.mxu0
    %v1595 = vadd.f32 0.0, %v1594
    %1596 = vdwg.mxu0
    %v1599 = vunpack.c.l.b16 %v1563
    %v1600 = vunpack.c.l.b16 %v1564
    %v1601 = vpack.c.b16 %v1600, %v1599
    %v1604 = vunpack.c.l.b16 %v648
    %v1605 = vunpack.c.l.b16 %v649
    %v1606 = vpack.c.b16 %v1605, %v1604
    %v1609 = vsel %vm772, %v1601, 0
    %1611 = vmatpush.bf16.msra.mxu0 0
    %1612 = vmatpush.bf16.msra.mxu0 0
    %1613 = vmatpush.bf16.msra.mxu0 0
    %1614 = vmatpush.bf16.msra.mxu0 0
    %1615 = vmatpush.bf16.msra.mxu0 0
    %1616 = vmatpush.bf16.msra.mxu0 0
    %1617 = vmatpush.bf16.msra.mxu0 0
    %1618 = vmatpush.bf16.msra.mxu0 %v1606
    %1619 = vmatmul.bf16.gmra.mxu0 %v1609
    %v1620 = vpop.f32.mrf.mxu0
    %v1621 = vadd.f32 0.0, %v1620
    %v1622 = vpop.f32.mrf.mxu0
    %v1623 = vadd.f32 0.0, %v1622
    %1624 = vdwg.mxu0
    %v1627 = vunpack.c.l.b16 %v1565
    %v1628 = vunpack.c.l.b16 %v1566
    %v1629 = vpack.c.b16 %v1628, %v1627
    %v1632 = vunpack.c.l.b16 %v650
    %v1633 = vunpack.c.l.b16 %v651
    %v1634 = vpack.c.b16 %v1633, %v1632
    %v1637 = vsel %vm772, %v1629, 0
    %1639 = vmatpush.bf16.msra.mxu0 0
    %1640 = vmatpush.bf16.msra.mxu0 0
    %1641 = vmatpush.bf16.msra.mxu0 0
    %1642 = vmatpush.bf16.msra.mxu0 0
    %1643 = vmatpush.bf16.msra.mxu0 0
    %1644 = vmatpush.bf16.msra.mxu0 0
    %1645 = vmatpush.bf16.msra.mxu0 0
    %1646 = vmatpush.bf16.msra.mxu0 %v1634
    %1647 = vmatmul.bf16.gmra.mxu0 %v1637
    %v1648 = vpop.f32.mrf.mxu0
    %v1649 = vadd.f32 0.0, %v1648
    %v1650 = vpop.f32.mrf.mxu0
    %v1651 = vadd.f32 0.0, %v1650
    %1652 = vdwg.mxu0
    %v1655 = vunpack.c.l.b16 %v1567
    %v1656 = vunpack.c.l.b16 %v1568
    %v1657 = vpack.c.b16 %v1656, %v1655
    %v1660 = vunpack.c.l.b16 %v652
    %v1661 = vunpack.c.l.b16 %v653
    %v1662 = vpack.c.b16 %v1661, %v1660
    %v1665 = vsel %vm772, %v1657, 0
    %1667 = vmatpush.bf16.msra.mxu0 0
    %1668 = vmatpush.bf16.msra.mxu0 0
    %1669 = vmatpush.bf16.msra.mxu0 0
    %1670 = vmatpush.bf16.msra.mxu0 0
    %1671 = vmatpush.bf16.msra.mxu0 0
    %1672 = vmatpush.bf16.msra.mxu0 0
    %1673 = vmatpush.bf16.msra.mxu0 0
    %1674 = vmatpush.bf16.msra.mxu0 %v1662
    %1675 = vmatmul.bf16.gmra.mxu0 %v1665
    %v1676 = vpop.f32.mrf.mxu0
    %v1677 = vadd.f32 0.0, %v1676
    %v1678 = vpop.f32.mrf.mxu0
    %v1679 = vadd.f32 0.0, %v1678
    %1680 = vdwg.mxu0
    %v1681 = vxor.u32 %v1593, 2147483648
    %v1682 = vxor.u32 %v1595, 2147483648
    %v1683 = vxor.u32 %v1621, 2147483648
    %v1684 = vxor.u32 %v1623, 2147483648
    %v1685 = vxor.u32 %v1649, 2147483648
    %v1686 = vxor.u32 %v1651, 2147483648
    %v1687 = vxor.u32 %v1677, 2147483648
    %v1688 = vxor.u32 %v1679, 2147483648
    %v1689 = vmul.f32 %v1681, 1.442695
    %v1690 = vpow.pop %v1689
    %v1691 = vmul.f32 %v1682, 1.442695
    %v1692 = vpow.pop %v1691
    %v1693 = vmul.f32 %v1683, 1.442695
    %v1694 = vpow.pop %v1693
    %v1695 = vmul.f32 %v1684, 1.442695
    %v1696 = vpow.pop %v1695
    %v1697 = vmul.f32 %v1685, 1.442695
    %v1698 = vpow.pop %v1697
    %v1699 = vmul.f32 %v1686, 1.442695
    %v1700 = vpow.pop %v1699
    %v1701 = vmul.f32 %v1687, 1.442695
    %v1702 = vpow.pop %v1701
    %v1703 = vmul.f32 %v1688, 1.442695
    %v1704 = vpow.pop %v1703
    %v1705 = vadd.f32 %v1690, 1.0
    %v1706 = vadd.f32 %v1692, 1.0
    %v1707 = vadd.f32 %v1694, 1.0
    %v1708 = vadd.f32 %v1696, 1.0
    %v1709 = vadd.f32 %v1698, 1.0
    %v1710 = vadd.f32 %v1700, 1.0
    %v1711 = vadd.f32 %v1702, 1.0
    %v1712 = vadd.f32 %v1704, 1.0
    %v1713 = vrcp.pop %v1705
    %v1714 = vmul.f32 %v1705, %v1713
    %v1715 = vsub.f32 1.0, %v1714
    %v1716 = vmul.f32 %v1713, %v1715
    %v1717 = vadd.f32 %v1713, %v1716
    %vm1718 = vweird.f32 %v1705
    %vm1719 = vweird.f32 %v1713
    %vm1720 = vmor %vm1718, %vm1719
    %v1721 = vsel %vm1720, %v1713, %v1717
    %v1722 = vand.u32 2147483647, %v1705
    %vm1723 = vcmp.eq.f32.partialorder %v1722, 8.507059e+37
    %v1724 = vand.u32 %v1705, 2147483648
    %v1725 = vor.u32 1.1754944e-38, %v1724
    %v1726 = vsel %vm1723, %v1725, %v1721
    %v1727 = vmul.f32 1.0, %v1726
    %v1728 = vrcp.pop %v1706
    %v1729 = vmul.f32 %v1706, %v1728
    %v1730 = vsub.f32 1.0, %v1729
    %v1731 = vmul.f32 %v1728, %v1730
    %v1732 = vadd.f32 %v1728, %v1731
    %vm1733 = vweird.f32 %v1706
    %vm1734 = vweird.f32 %v1728
    %vm1735 = vmor %vm1733, %vm1734
    %v1736 = vsel %vm1735, %v1728, %v1732
    %v1737 = vand.u32 2147483647, %v1706
    %vm1738 = vcmp.eq.f32.partialorder %v1737, 8.507059e+37
    %v1739 = vand.u32 %v1706, 2147483648
    %v1740 = vor.u32 1.1754944e-38, %v1739
    %v1741 = vsel %vm1738, %v1740, %v1736
    %v1742 = vmul.f32 1.0, %v1741
    %v1743 = vrcp.pop %v1707
    %v1744 = vmul.f32 %v1707, %v1743
    %v1745 = vsub.f32 1.0, %v1744
    %v1746 = vmul.f32 %v1743, %v1745
    %v1747 = vadd.f32 %v1743, %v1746
    %vm1748 = vweird.f32 %v1707
    %vm1749 = vweird.f32 %v1743
    %vm1750 = vmor %vm1748, %vm1749
    %v1751 = vsel %vm1750, %v1743, %v1747
    %v1752 = vand.u32 2147483647, %v1707
    %vm1753 = vcmp.eq.f32.partialorder %v1752, 8.507059e+37
    %v1754 = vand.u32 %v1707, 2147483648
    %v1755 = vor.u32 1.1754944e-38, %v1754
    %v1756 = vsel %vm1753, %v1755, %v1751
    %v1757 = vmul.f32 1.0, %v1756
    %v1758 = vrcp.pop %v1708
    %v1759 = vmul.f32 %v1708, %v1758
    %v1760 = vsub.f32 1.0, %v1759
    %v1761 = vmul.f32 %v1758, %v1760
    %v1762 = vadd.f32 %v1758, %v1761
    %vm1763 = vweird.f32 %v1708
    %vm1764 = vweird.f32 %v1758
    %vm1765 = vmor %vm1763, %vm1764
    %v1766 = vsel %vm1765, %v1758, %v1762
    %v1767 = vand.u32 2147483647, %v1708
    %vm1768 = vcmp.eq.f32.partialorder %v1767, 8.507059e+37
    %v1769 = vand.u32 %v1708, 2147483648
    %v1770 = vor.u32 1.1754944e-38, %v1769
    %v1771 = vsel %vm1768, %v1770, %v1766
    %v1772 = vmul.f32 1.0, %v1771
    %v1773 = vrcp.pop %v1709
    %v1774 = vmul.f32 %v1709, %v1773
    %v1775 = vsub.f32 1.0, %v1774
    %v1776 = vmul.f32 %v1773, %v1775
    %v1777 = vadd.f32 %v1773, %v1776
    %vm1778 = vweird.f32 %v1709
    %vm1779 = vweird.f32 %v1773
    %vm1780 = vmor %vm1778, %vm1779
    %v1781 = vsel %vm1780, %v1773, %v1777
    %v1782 = vand.u32 2147483647, %v1709
    %vm1783 = vcmp.eq.f32.partialorder %v1782, 8.507059e+37
    %v1784 = vand.u32 %v1709, 2147483648
    %v1785 = vor.u32 1.1754944e-38, %v1784
    %v1786 = vsel %vm1783, %v1785, %v1781
    %v1787 = vmul.f32 1.0, %v1786
    %v1788 = vrcp.pop %v1710
    %v1789 = vmul.f32 %v1710, %v1788
    %v1790 = vsub.f32 1.0, %v1789
    %v1791 = vmul.f32 %v1788, %v1790
    %v1792 = vadd.f32 %v1788, %v1791
    %vm1793 = vweird.f32 %v1710
    %vm1794 = vweird.f32 %v1788
    %vm1795 = vmor %vm1793, %vm1794
    %v1796 = vsel %vm1795, %v1788, %v1792
    %v1797 = vand.u32 2147483647, %v1710
    %vm1798 = vcmp.eq.f32.partialorder %v1797, 8.507059e+37
    %v1799 = vand.u32 %v1710, 2147483648
    %v1800 = vor.u32 1.1754944e-38, %v1799
    %v1801 = vsel %vm1798, %v1800, %v1796
    %v1802 = vmul.f32 1.0, %v1801
    %v1803 = vrcp.pop %v1711
    %v1804 = vmul.f32 %v1711, %v1803
    %v1805 = vsub.f32 1.0, %v1804
    %v1806 = vmul.f32 %v1803, %v1805
    %v1807 = vadd.f32 %v1803, %v1806
    %vm1808 = vweird.f32 %v1711
    %vm1809 = vweird.f32 %v1803
    %vm1810 = vmor %vm1808, %vm1809
    %v1811 = vsel %vm1810, %v1803, %v1807
    %v1812 = vand.u32 2147483647, %v1711
    %vm1813 = vcmp.eq.f32.partialorder %v1812, 8.507059e+37
    %v1814 = vand.u32 %v1711, 2147483648
    %v1815 = vor.u32 1.1754944e-38, %v1814
    %v1816 = vsel %vm1813, %v1815, %v1811
    %v1817 = vmul.f32 1.0, %v1816
    %v1818 = vrcp.pop %v1712
    %v1819 = vmul.f32 %v1712, %v1818
    %v1820 = vsub.f32 1.0, %v1819
    %v1821 = vmul.f32 %v1818, %v1820
    %v1822 = vadd.f32 %v1818, %v1821
    %vm1823 = vweird.f32 %v1712
    %vm1824 = vweird.f32 %v1818
    %vm1825 = vmor %vm1823, %vm1824
    %v1826 = vsel %vm1825, %v1818, %v1822
    %v1827 = vand.u32 2147483647, %v1712
    %vm1828 = vcmp.eq.f32.partialorder %v1827, 8.507059e+37
    %v1829 = vand.u32 %v1712, 2147483648
    %v1830 = vor.u32 1.1754944e-38, %v1829
    %v1831 = vsel %vm1828, %v1830, %v1826
    %v1832 = vmul.f32 1.0, %v1831
    %v1833 = vrot.slane %v1787, 4
    %v1834 = vsel %vm198, %v1833, %v1727
    %v1835 = vrot.slane %v1727, 4
    %v1836 = vsel %vm198, %v1787, %v1835
    %v1838 = vunpack.c.l.s4 1983009808
    %v1839 = vunpack.c.0.s8 %v1838
    %v1840 = vperm.slane %v1834, %v1839
    %v1842 = vunpack.c.l.s4 1983009808
    %v1843 = vunpack.c.0.s8 %v1842
    %v1844 = vperm.slane %v1836, %v1843
    %v1845 = vrot.slane %v1817, 4
    %v1846 = vsel %vm198, %v1845, %v1757
    %v1847 = vrot.slane %v1757, 4
    %v1848 = vsel %vm198, %v1817, %v1847
    %v1850 = vunpack.c.l.s4 1983009808
    %v1851 = vunpack.c.0.s8 %v1850
    %v1852 = vperm.slane %v1846, %v1851
    %v1854 = vunpack.c.l.s4 1983009808
    %v1855 = vunpack.c.0.s8 %v1854
    %v1856 = vperm.slane %v1848, %v1855
    %v1857 = vrot.slane %v1852, 4
    %v1858 = vsel %vm198, %v1857, %v1840
    %v1859 = vrot.slane %v1840, 4
    %v1860 = vsel %vm198, %v1852, %v1859
    %v1862 = vunpack.c.l.s4 1934713408
    %v1863 = vunpack.c.0.s8 %v1862
    %v1864 = vperm.slane %v1858, %v1863
    %v1866 = vunpack.c.l.s4 1934713408
    %v1867 = vunpack.c.0.s8 %v1866
    %v1868 = vperm.slane %v1860, %v1867
    %v1869 = vrot.slane %v1856, 4
    %v1870 = vsel %vm198, %v1869, %v1844
    %v1871 = vrot.slane %v1844, 4
    %v1872 = vsel %vm198, %v1856, %v1871
    %v1874 = vunpack.c.l.s4 1934713408
    %v1875 = vunpack.c.0.s8 %v1874
    %v1876 = vperm.slane %v1870, %v1875
    %v1878 = vunpack.c.l.s4 1934713408
    %v1879 = vunpack.c.0.s8 %v1878
    %v1880 = vperm.slane %v1872, %v1879
    %v1881 = vrot.slane %v1864, 4
    %v1882 = vsel %vm198, 0.0, %v1881
    %v1883 = vrot.slane %v1868, 4
    %v1884 = vsel %vm198, 0.0, %v1883
    %v1885 = vrot.slane %v1876, 4
    %v1886 = vsel %vm198, 0.0, %v1885
    %v1887 = vrot.slane %v1880, 4
    %v1888 = vsel %vm198, 0.0, %v1887
    %v1889 = vrot.slane %v1802, 4
    %v1890 = vsel %vm198, %v1889, %v1742
    %v1891 = vrot.slane %v1742, 4
    %v1892 = vsel %vm198, %v1802, %v1891
    %v1894 = vunpack.c.l.s4 1983009808
    %v1895 = vunpack.c.0.s8 %v1894
    %v1896 = vperm.slane %v1890, %v1895
    %v1898 = vunpack.c.l.s4 1983009808
    %v1899 = vunpack.c.0.s8 %v1898
    %v1900 = vperm.slane %v1892, %v1899
    %v1901 = vrot.slane %v1832, 4
    %v1902 = vsel %vm198, %v1901, %v1772
    %v1903 = vrot.slane %v1772, 4
    %v1904 = vsel %vm198, %v1832, %v1903
    %v1906 = vunpack.c.l.s4 1983009808
    %v1907 = vunpack.c.0.s8 %v1906
    %v1908 = vperm.slane %v1902, %v1907
    %v1910 = vunpack.c.l.s4 1983009808
    %v1911 = vunpack.c.0.s8 %v1910
    %v1912 = vperm.slane %v1904, %v1911
    %v1913 = vrot.slane %v1908, 4
    %v1914 = vsel %vm198, %v1913, %v1896
    %v1915 = vrot.slane %v1896, 4
    %v1916 = vsel %vm198, %v1908, %v1915
    %v1918 = vunpack.c.l.s4 1934713408
    %v1919 = vunpack.c.0.s8 %v1918
    %v1920 = vperm.slane %v1914, %v1919
    %v1922 = vunpack.c.l.s4 1934713408
    %v1923 = vunpack.c.0.s8 %v1922
    %v1924 = vperm.slane %v1916, %v1923
    %v1925 = vrot.slane %v1912, 4
    %v1926 = vsel %vm198, %v1925, %v1900
    %v1927 = vrot.slane %v1900, 4
    %v1928 = vsel %vm198, %v1912, %v1927
    %v1930 = vunpack.c.l.s4 1934713408
    %v1931 = vunpack.c.0.s8 %v1930
    %v1932 = vperm.slane %v1926, %v1931
    %v1934 = vunpack.c.l.s4 1934713408
    %v1935 = vunpack.c.0.s8 %v1934
    %v1936 = vperm.slane %v1928, %v1935
    %v1937 = vrot.slane %v1920, 4
    %v1938 = vsel %vm198, 0.0, %v1937
    %v1939 = vrot.slane %v1924, 4
    %v1940 = vsel %vm198, 0.0, %v1939
    %v1941 = vrot.slane %v1932, 4
    %v1942 = vsel %vm198, 0.0, %v1941
    %v1943 = vrot.slane %v1936, 4
    %v1944 = vsel %vm198, 0.0, %v1943
    %1946 = vrot.lane.b32.xlu0 %v1882, 16
    %v1947 = vpop.permute.xlu0 %1946
    %1950 = vrot.lane.b32.xlu0 %v1868, 32
    %v1951 = vpop.permute.xlu0 %1950
    %1954 = vrot.lane.b32.xlu0 %v1884, 48
    %v1955 = vpop.permute.xlu0 %1954
    %1958 = vrot.lane.b32.xlu0 %v1876, 64
    %v1959 = vpop.permute.xlu0 %1958
    %1962 = vrot.lane.b32.xlu0 %v1886, 80
    %v1963 = vpop.permute.xlu0 %1962
    %1966 = vrot.lane.b32.xlu0 %v1880, 96
    %v1967 = vpop.permute.xlu0 %1966
    %1970 = vrot.lane.b32.xlu0 %v1888, 112
    %v1971 = vpop.permute.xlu0 %1970
    %1974 = vrot.lane.b32.xlu0 %v1938, 16
    %v1975 = vpop.permute.xlu0 %1974
    %1978 = vrot.lane.b32.xlu0 %v1924, 32
    %v1979 = vpop.permute.xlu0 %1978
    %1982 = vrot.lane.b32.xlu0 %v1940, 48
    %v1983 = vpop.permute.xlu0 %1982
    %1986 = vrot.lane.b32.xlu0 %v1932, 64
    %v1987 = vpop.permute.xlu0 %1986
    %1990 = vrot.lane.b32.xlu0 %v1942, 80
    %v1991 = vpop.permute.xlu0 %1990
    %1994 = vrot.lane.b32.xlu0 %v1936, 96
    %v1995 = vpop.permute.xlu0 %1994
    %1998 = vrot.lane.b32.xlu0 %v1944, 112
    %v1999 = vpop.permute.xlu0 %1998
    %v2001 = vsel %vm772, %v1864, %v1947
    %v2002 = vsel %vm71, %v2001, %v1951
    %v2003 = vsel %vm1303, %v2002, %v1955
    %v2004 = vsel %vm1305, %v2003, %v1959
    %v2005 = vsel %vm1307, %v2004, %v1963
    %v2006 = vsel %vm1309, %v2005, %v1967
    %v2007 = vsel %vm1311, %v2006, %v1971
    %v2008 = vsel %vm772, %v1920, %v1975
    %v2009 = vsel %vm71, %v2008, %v1979
    %v2010 = vsel %vm1303, %v2009, %v1983
    %v2011 = vsel %vm1305, %v2010, %v1987
    %v2012 = vsel %vm1307, %v2011, %v1991
    %v2013 = vsel %vm1309, %v2012, %v1995
    %v2014 = vsel %vm1311, %v2013, %v1999
    %v2017 = vrot.slane %v2014, 4
    %v2018 = vsel %vm1323, %v2007, %v2017
    %s2020 = scalar_lea.vmem [#allocation8], 8
    %2021 = vst [vmem:[%s2020] sm:$0xff] %v2018
    // Predicated region
    $region26: #{tpu_custom_call.1} parent=1 // pred_check
      _
    $region27: #{tpu_custom_call.1} parent=1 // pred_check_branch
      %2023 = sbr.rel (0) target = $region29
    $region28: #{tpu_custom_call.1} parent=1 // pred_region
      %2025 = vsyncadd [#allocation4], 0
      %s2026 = sshll.u32 [#allocation8], 4
      %s2027 = int_to_ptr.vmem [resolvable:$true] %s2026
      %s2028 = sshll.u32 %s3, 4
      %s2029 = int_to_ptr.hbm [resolvable:$true] %s2028
      %2034 = dma.vmem_to_hbm [thread:$0]  %s2027, 256, %s2029, [#allocation4], 128, 128, 8
    $region29: #{tpu_custom_call.1} parent=1 // pred_fallthru
      _
    // Predicated region
    $region30: #{tpu_custom_call.1} parent=1 // pred_check
      _
    $region31: #{tpu_custom_call.1} parent=1 // pred_check_branch
      %2036 = sbr.rel (0) target = $region33
    $region32: #{tpu_custom_call.1} parent=1 // pred_region
      %2038 = dma.done [#allocation4], 256
    $region33: #{tpu_custom_call.1} parent=1 // pred_fallthru
      _
    %2039 = vsyncpa [#allocation3], 1
    %2040 = vsyncpa [#allocation6], 1
    %2041 = vsyncpa [#allocation4], 1

</llo_original>
